<compile_context>
chip_gen: v5e
topology: v5e:2x2
jax: 0.10.0
libtpu: 0.0.40
codegen_flags: <defaults>
</compile_context>

<pallas_src>
import functools

import jax
import jax.numpy as jnp
from jax import lax
from jax.experimental import pallas as pl
from jax.experimental.pallas import tpu as pltpu

# ---- module config (matches LinearAttention(dim=4, heads=4, dim_head=32)) ----
DIM = 4
HEADS = 4
DIM_HEAD = 32
HIDDEN = HEADS * DIM_HEAD          # 128
SCALE = DIM_HEAD ** (-0.5)
EPS = 1e-5                         # nn.GroupNorm default eps


def _fast_recip(d):
    """EUP approximate reciprocal (frees VALU slots) + one Newton step (rel err ~1e-8)."""
    r = pl.reciprocal(d, approx=True)
    return r * (2.0 - d * r)


def _linear_attention_kernel(x_ref, wqkv_t_ref, wout_ref, gnb_ref, mask_ref, o_ref, *, bb):
    # Resident small operands loaded once per grid step (shared across the Bb sub-elements).
    wqkv_t = wqkv_t_ref[...]                     # (C, 3*HIDDEN), lane-dense
    wout = wout_ref[...]                         # (C, HIDDEN)
    gnb = gnb_ref[...]                           # (C, 3) = [b_out | gamma | beta]
    b_out = gnb[:, 0:1]
    gamma = gnb[:, 1:2]
    beta = gnb[:, 2:3]
    mask_f = mask_ref[...]                       # (HIDDEN, HIDDEN) block-diagonal head mask

    # bb is a small compile-time constant (1..8): fully-unrolled straight-line code.
    for i in range(bb):
        x = x_ref[i]                                                      # (C, N)

        # to_qkv: 1x1 conv (bias=False), contract over C with the lane-dense weight.
        qkv = lax.dot_general(wqkv_t, x, (((0,), (0,)), ((), ())),
                              preferred_element_type=jnp.float32)         # (3*HIDDEN, N)

        # ---- k / ctx / wc path FIRST: only the tiny (C, 128) wc stays live across the q path.
        k = qkv[HIDDEN:2 * HIDDEN, :]
        v = qkv[2 * HIDDEN:3 * HIDDEN, :]

        # k: softmax over the spatial axis (torch dim=-1) — per-row lane softmax.
        k_max = jnp.max(k, axis=1, keepdims=True)                         # (128, 1)
        k_exp = jnp.exp(k - k_max)
        k_soft = k_exp * _fast_recip(jnp.sum(k_exp, axis=1, keepdims=True))

        # All-head context in ONE 128-wide MXU matmul; zero cross-head blocks with the mask.
        # CTX[h*32+d, h*32+e] = sum_n k_h[d,n] * v_h[e,n]
        ctx = lax.dot_general(k_soft, v, (((1,), (1,)), ((), ())),
                              preferred_element_type=jnp.float32)         # (128, 128)
        ctx = ctx * mask_f

        # Fold to_out's 1x1-conv weight (and the q scale) into the tiny context:
        # Wc[c, h*32+d] = sum_e W_out[c, h*32+e] * ctx_h[d, e]
        wc = lax.dot_general(wout, ctx, (((1,), (1,)), ((), ())),
                             preferred_element_type=jnp.float32) * SCALE  # (C, 128)

        # ---- q path: softmax over dim_head within each head (torch dim=-2).
        # The per-column max over all 128 rows is a valid shift for every head (identical
        # softmax result); a per-head masked max would only be needed if one head's logits
        # were orders of magnitude below another's (underflow robustness).
        q = qkv[0:HIDDEN, :]
        q_max = jnp.max(q, axis=0, keepdims=True)                         # (1, N)
        q_exp = jnp.exp(q - q_max)                                        # (128, N)
        # Per-head denominators broadcast back to all 32 rows of the head via one MXU matmul.
        q_den = jnp.dot(mask_f, q_exp, preferred_element_type=jnp.float32)
        q_soft = q_exp * _fast_recip(q_den)

        # Single output matmul + bias (the (128, N) out_hidden intermediate is never built).
        y = jnp.dot(wc, q_soft, preferred_element_type=jnp.float32) + b_out   # (C, N)

        # GroupNorm(num_groups=1, C): two-pass (centered) stats over all channels & spatial.
        inv_cnt = 1.0 / (y.shape[0] * y.shape[1])
        mean = jnp.sum(y) * inv_cnt
        ym = y - mean
        var = jnp.sum(ym * ym) * inv_cnt
        o_ref[i] = ym * lax.rsqrt(var + EPS) * gamma + beta


def prepare_linear_attention_params(w_qkv, w_out, b_out, gamma, beta):
    """One-time parameter preparation (do NOT call per forward)."""
    C = DIM
    w_qkv_t = jnp.asarray(w_qkv, jnp.float32).T                            # (C, 3*HIDDEN) lane-dense
    w_out_f = jnp.asarray(w_out, jnp.float32)                              # (C, HIDDEN)
    gnb = jnp.stack(
        [jnp.asarray(b_out, jnp.float32).reshape(C),
         jnp.asarray(gamma, jnp.float32).reshape(C),
         jnp.asarray(beta, jnp.float32).reshape(C)], axis=-1)              # (C, 3)
    rows = jnp.arange(HIDDEN) // DIM_HEAD
    head_mask = (rows[:, None] == rows[None, :]).astype(jnp.float32)       # (128, 128)
    return (w_qkv_t, w_out_f, gnb, head_mask)


def _pick_block_b(B):
    # Amortize per-grid-step overhead over several batch elements, but keep >= 2 grid steps
    # whenever possible so v7x's two TensorCores both get work.
    for bb in (8, 4, 2):
        if B % bb == 0 and B // bb >= 2:
            return bb
    return 1


def linear_attention(x_nchw, params, block_b=None):
    w_qkv_t, w_out_f, gnb, head_mask = params
    B, C, H, W = x_nchw.shape
    N = H * W
    x = x_nchw.reshape(B, C, N).astype(jnp.float32)

    bb = _pick_block_b(B) if block_b is None else block_b
    assert B % bb == 0, "block_b must divide the batch size"
    grid = (B // bb,)

    kernel = functools.partial(_linear_attention_kernel, bb=bb)
    out = pl.pallas_call(
        kernel,
        out_shape=jax.ShapeDtypeStruct((B, C, N), jnp.float32),
        grid_spec=pltpu.PrefetchScalarGridSpec(
            num_scalar_prefetch=0,
            grid=grid,
            in_specs=[
                pl.BlockSpec((bb, C, N), lambda b: (b, 0, 0)),             # x block (Bb, C, N)
                pl.BlockSpec((C, 3 * HIDDEN), lambda b: (0, 0)),           # W_qkv^T (4, 384)
                pl.BlockSpec((C, HIDDEN), lambda b: (0, 0)),               # W_out   (4, 128)
                pl.BlockSpec((C, 3), lambda b: (0, 0)),                    # [b_out|gamma|beta]
                pl.BlockSpec((HIDDEN, HIDDEN), lambda b: (0, 0)),          # head mask (resident)
            ],
            out_specs=pl.BlockSpec((bb, C, N), lambda b: (b, 0, 0)),
        ),
        compiler_params=pltpu.CompilerParams(dimension_semantics=("parallel",)),
    )(x, w_qkv_t, w_out_f, gnb, head_mask)
    return out.reshape(B, C, H, W)


def linear_attention_reference(x, w_qkv, w_out, b_out, gamma, beta):
    """Pure-JAX reference matching the PyTorch forward."""
    B, C, H, W = x.shape
    N = H * W
    xf = x.reshape(B, C, N)
    qkv = jnp.einsum('oc,bcn->bon', w_qkv, xf)
    q, k, v = jnp.split(qkv, 3, axis=1)
    q, k, v = (t.reshape(B, HEADS, DIM_HEAD, N) for t in (q, k, v))
    q = jax.nn.softmax(q, axis=-2) * SCALE
    k = jax.nn.softmax(k, axis=-1)
    context = jnp.einsum('bhdn,bhen->bhde', k, v)
    out = jnp.einsum('bhde,bhdn->bhen', context, q)
    out = out.reshape(B, HIDDEN, N)
    y = jnp.einsum('oc,bcn->bon', w_out, out) + b_out[None, :, None]
    mean = jnp.mean(y, axis=(1, 2), keepdims=True)
    var = jnp.mean((y - mean) ** 2, axis=(1, 2), keepdims=True)
    y = (y - mean) / jnp.sqrt(var + EPS)
    y = y * gamma[None, :, None] + beta[None, :, None]
    return y.reshape(B, C, H, W)


if __name__ == "__main__":
    key = jax.random.PRNGKey(0)
    kx, kq, ko, kb, kg, kbt, kx2 = jax.random.split(key, 7)

    B, C, H, W = 2, DIM, 16, 16
    x = jax.random.normal(kx, (B, C, H, W), dtype=jnp.float32)

    # deterministic synthetic parameters (shapes from the module __init__)
    w_qkv = 0.1 * jax.random.normal(kq, (3 * HIDDEN, DIM), dtype=jnp.float32)   # Conv2d(dim, 3*hidden, 1, bias=False)
    w_out = 0.1 * jax.random.normal(ko, (DIM, HIDDEN), dtype=jnp.float32)       # Conv2d(hidden, dim, 1)
    b_out = 0.1 * jax.random.normal(kb, (DIM,), dtype=jnp.float32)
    gamma = 1.0 + 0.1 * jax.random.normal(kg, (DIM,), dtype=jnp.float32)        # GroupNorm affine
    beta = 0.1 * jax.random.normal(kbt, (DIM,), dtype=jnp.float32)

    params = prepare_linear_attention_params(w_qkv, w_out, b_out, gamma, beta)  # one-time prep

    # B=2: Bb=1, grid=(2,) -> both v7x TensorCores busy.
    out = linear_attention(x, params)
    out = jax.block_until_ready(out)
    ref = linear_attention_reference(x, w_qkv, w_out, b_out, gamma, beta)
    assert out.shape == (B, C, H, W)
    assert jnp.allclose(out, ref, atol=1e-4, rtol=1e-4), "Pallas kernel mismatch vs JAX reference (B=2)"

    # B=8: Bb=4 (auto), grid=(2,) -> exercises the multi-batch-per-step path.
    B2 = 8
    x2 = jax.random.normal(kx2, (B2, C, H, W), dtype=jnp.float32)
    out2 = jax.block_until_ready(linear_attention(x2, params))
    ref2 = linear_attention_reference(x2, w_qkv, w_out, b_out, gamma, beta)
    assert jnp.allclose(out2, ref2, atol=1e-4, rtol=1e-4), "Pallas kernel mismatch vs JAX reference (B=8)"

    print("KERNEL_OK")
</pallas_src>

<mosaic_0001>
module attributes {stable_mosaic.version = 11 : i64} {
  func.func @_linear_attention_kernel(%arg0: i32, %arg1: memref<1x4x256xf32, #tpu.memory_space<vmem>>, %arg2: memref<4x384xf32, #tpu.memory_space<vmem>>, %arg3: memref<4x128xf32, #tpu.memory_space<vmem>>, %arg4: memref<4x3xf32, #tpu.memory_space<vmem>>, %arg5: memref<128x128xf32, #tpu.memory_space<vmem>>, %arg6: memref<1x4x256xf32, #tpu.memory_space<vmem>>) attributes {dimension_semantics = [#tpu.dimension_semantics<parallel>], iteration_bounds = array<i64: 2>, scalar_prefetch = 0 : i64, scratch_operands = 0 : i64, tpu.core_type = #tpu.core_type<tc>, window_params = [{transform_indices = @transform_0, window_bounds = array<i64: 1, 4, 256>}, {pipeline_mode = #tpu.pipeline_mode<synchronous>, transform_indices = @transform_1, window_bounds = array<i64: 4, 384>}, {pipeline_mode = #tpu.pipeline_mode<synchronous>, transform_indices = @transform_2, window_bounds = array<i64: 4, 128>}, {pipeline_mode = #tpu.pipeline_mode<synchronous>, transform_indices = @transform_3, window_bounds = array<i64: 4, 3>}, {pipeline_mode = #tpu.pipeline_mode<synchronous>, transform_indices = @transform_4, window_bounds = array<i64: 128, 128>}, {transform_indices = @transform_5, window_bounds = array<i64: 1, 4, 256>}]} {
    %c0 = arith.constant 0 : index
    %c0_0 = arith.constant 0 : index
    %0 = vector.load %arg2[%c0, %c0_0] : memref<4x384xf32, #tpu.memory_space<vmem>>, vector<4x384xf32>
    %c0_1 = arith.constant 0 : index
    %c0_2 = arith.constant 0 : index
    %1 = vector.load %arg3[%c0_1, %c0_2] : memref<4x128xf32, #tpu.memory_space<vmem>>, vector<4x128xf32>
    %c0_3 = arith.constant 0 : index
    %c0_4 = arith.constant 0 : index
    %2 = vector.load %arg4[%c0_3, %c0_4] : memref<4x3xf32, #tpu.memory_space<vmem>>, vector<4x3xf32>
    %3 = vector.extract_strided_slice %2 {offsets = [0, 0], sizes = [4, 1], strides = [1, 1]} : vector<4x3xf32> to vector<4x1xf32>
    %4 = vector.extract_strided_slice %2 {offsets = [0, 1], sizes = [4, 1], strides = [1, 1]} : vector<4x3xf32> to vector<4x1xf32>
    %5 = vector.extract_strided_slice %2 {offsets = [0, 2], sizes = [4, 1], strides = [1, 1]} : vector<4x3xf32> to vector<4x1xf32>
    %c0_5 = arith.constant 0 : index
    %c0_6 = arith.constant 0 : index
    %6 = vector.load %arg5[%c0_5, %c0_6] : memref<128x128xf32, #tpu.memory_space<vmem>>, vector<128x128xf32>
    %c0_7 = arith.constant 0 : index
    %c0_8 = arith.constant 0 : index
    %c0_9 = arith.constant 0 : index
    %7 = vector.load %arg1[%c0_7, %c0_8, %c0_9] : memref<1x4x256xf32, #tpu.memory_space<vmem>>, vector<1x4x256xf32>
    %8 = vector.shape_cast %7 : vector<1x4x256xf32> to vector<4x256xf32>
    %cst = arith.constant dense<0.000000e+00> : vector<384x256xf32>
    %9 = tpu.matmul %0, %8, %cst {dimension_numbers = #tpu.dot_dimension_numbers<[0], [0], [1], [1], [0, 1, 1, 1], [], []>} : vector<4x384xf32>, vector<4x256xf32>, vector<384x256xf32> -> vector<384x256xf32>
    %10 = vector.extract_strided_slice %9 {offsets = [128, 0], sizes = [128, 256], strides = [1, 1]} : vector<384x256xf32> to vector<128x256xf32>
    %11 = vector.extract_strided_slice %9 {offsets = [256, 0], sizes = [128, 256], strides = [1, 1]} : vector<384x256xf32> to vector<128x256xf32>
    %cst_10 = arith.constant dense<0xFF800000> : vector<128xf32>
    %12 = vector.multi_reduction <maximumf>, %10, %cst_10 [1] : vector<128x256xf32> to vector<128xf32>
    %13 = vector.shape_cast %12 : vector<128xf32> to vector<128x1xf32>
    %14 = vector.broadcast %13 : vector<128x1xf32> to vector<128x256xf32>
    %15 = arith.subf %10, %14 : vector<128x256xf32>
    %16 = math.exp %15 : vector<128x256xf32>
    %cst_11 = arith.constant dense<0.000000e+00> : vector<128xf32>
    %17 = vector.multi_reduction <add>, %16, %cst_11 [1] : vector<128x256xf32> to vector<128xf32>
    %18 = vector.shape_cast %17 : vector<128xf32> to vector<128x1xf32>
    %19 = tpu.reciprocal %18 {approx = true} : vector<128x1xf32> -> vector<128x1xf32>
    %20 = arith.mulf %18, %19 : vector<128x1xf32>
    %cst_12 = arith.constant 2.000000e+00 : f32
    %21 = vector.broadcast %cst_12 : f32 to vector<128x1xf32>
    %22 = arith.subf %21, %20 : vector<128x1xf32>
    %23 = arith.mulf %19, %22 : vector<128x1xf32>
    %24 = vector.broadcast %23 : vector<128x1xf32> to vector<128x256xf32>
    %25 = arith.mulf %16, %24 : vector<128x256xf32>
    %cst_13 = arith.constant dense<0.000000e+00> : vector<128x128xf32>
    %26 = tpu.matmul %25, %11, %cst_13 {dimension_numbers = #tpu.dot_dimension_numbers<[1], [1], [0], [0], [0, 0, 1, 0], [], []>} : vector<128x256xf32>, vector<128x256xf32>, vector<128x128xf32> -> vector<128x128xf32>
    %27 = arith.mulf %26, %6 : vector<128x128xf32>
    %cst_14 = arith.constant dense<0.000000e+00> : vector<4x128xf32>
    %28 = tpu.matmul %1, %27, %cst_14 {dimension_numbers = #tpu.dot_dimension_numbers<[1], [1], [0], [0], [0, 0, 1, 0], [], []>} : vector<4x128xf32>, vector<128x128xf32>, vector<4x128xf32> -> vector<4x128xf32>
    %cst_15 = arith.constant 0.176776692 : f32
    %29 = vector.broadcast %cst_15 : f32 to vector<4x128xf32>
    %30 = arith.mulf %28, %29 : vector<4x128xf32>
    %31 = vector.extract_strided_slice %9 {offsets = [0, 0], sizes = [128, 256], strides = [1, 1]} : vector<384x256xf32> to vector<128x256xf32>
    %cst_16 = arith.constant dense<0xFF800000> : vector<256xf32>
    %32 = vector.multi_reduction <maximumf>, %31, %cst_16 [0] : vector<128x256xf32> to vector<256xf32>
    %33 = vector.shape_cast %32 : vector<256xf32> to vector<1x256xf32>
    %34 = vector.broadcast %33 : vector<1x256xf32> to vector<128x256xf32>
    %35 = arith.subf %31, %34 : vector<128x256xf32>
    %36 = math.exp %35 : vector<128x256xf32>
    %cst_17 = arith.constant dense<0.000000e+00> : vector<128x256xf32>
    %37 = tpu.matmul %6, %36, %cst_17 {dimension_numbers = #tpu.dot_dimension_numbers<[1], [0], [0], [1], [0, 0, 1, 1], [], []>} : vector<128x128xf32>, vector<128x256xf32>, vector<128x256xf32> -> vector<128x256xf32>
    %38 = tpu.reciprocal %37 {approx = true} : vector<128x256xf32> -> vector<128x256xf32>
    %39 = arith.mulf %37, %38 : vector<128x256xf32>
    %cst_18 = arith.constant 2.000000e+00 : f32
    %40 = vector.broadcast %cst_18 : f32 to vector<128x256xf32>
    %41 = arith.subf %40, %39 : vector<128x256xf32>
    %42 = arith.mulf %38, %41 : vector<128x256xf32>
    %43 = arith.mulf %36, %42 : vector<128x256xf32>
    %cst_19 = arith.constant dense<0.000000e+00> : vector<4x256xf32>
    %44 = tpu.matmul %30, %43, %cst_19 {dimension_numbers = #tpu.dot_dimension_numbers<[1], [0], [0], [1], [0, 0, 1, 1], [], []>} : vector<4x128xf32>, vector<128x256xf32>, vector<4x256xf32> -> vector<4x256xf32>
    %45 = vector.broadcast %3 : vector<4x1xf32> to vector<4x256xf32>
    %46 = arith.addf %44, %45 : vector<4x256xf32>
    %47 = vector.shape_cast %46 : vector<4x256xf32> to vector<1x4x256xf32>
    %cst_20 = arith.constant dense<0.000000e+00> : vector<1xf32>
    %48 = vector.multi_reduction <add>, %47, %cst_20 [1, 2] : vector<1x4x256xf32> to vector<1xf32>
    %49 = vector.shape_cast %48 : vector<1xf32> to vector<1x1x1xf32>
    %50 = vector.extract %49[0, 0, 0] : f32 from vector<1x1x1xf32>
    %cst_21 = arith.constant 9.765625E-4 : f32
    %51 = arith.mulf %50, %cst_21 : f32
    %52 = vector.broadcast %51 : f32 to vector<4x256xf32>
    %53 = arith.subf %46, %52 : vector<4x256xf32>
    %54 = arith.mulf %53, %53 : vector<4x256xf32>
    %55 = vector.shape_cast %54 : vector<4x256xf32> to vector<1x4x256xf32>
    %cst_22 = arith.constant dense<0.000000e+00> : vector<1xf32>
    %56 = vector.multi_reduction <add>, %55, %cst_22 [1, 2] : vector<1x4x256xf32> to vector<1xf32>
    %57 = vector.shape_cast %56 : vector<1xf32> to vector<1x1x1xf32>
    %58 = vector.extract %57[0, 0, 0] : f32 from vector<1x1x1xf32>
    %cst_23 = arith.constant 9.765625E-4 : f32
    %59 = arith.mulf %58, %cst_23 : f32
    %cst_24 = arith.constant 9.99999974E-6 : f32
    %60 = arith.addf %59, %cst_24 : f32
    %61 = math.rsqrt %60 : f32
    %62 = vector.broadcast %61 : f32 to vector<4x256xf32>
    %63 = arith.mulf %53, %62 : vector<4x256xf32>
    %64 = vector.broadcast %4 : vector<4x1xf32> to vector<4x256xf32>
    %65 = arith.mulf %63, %64 : vector<4x256xf32>
    %66 = vector.broadcast %5 : vector<4x1xf32> to vector<4x256xf32>
    %67 = arith.addf %65, %66 : vector<4x256xf32>
    %c0_25 = arith.constant 0 : index
    %c0_26 = arith.constant 0 : index
    %c0_27 = arith.constant 0 : index
    %68 = vector.load %arg6[%c0_25, %c0_26, %c0_27] : memref<1x4x256xf32, #tpu.memory_space<vmem>>, vector<1x4x256xf32>
    %69 = vector.shape_cast %68 : vector<1x4x256xf32> to vector<4x256xf32>
    %70 = vector.shape_cast %67 : vector<4x256xf32> to vector<1x4x256xf32>
    tpu.vector_store %arg6[%c0_25, %c0_26, %c0_27], %70 {strides = array<i32>} : memref<1x4x256xf32, #tpu.memory_space<vmem>>, vector<1x4x256xf32>,
    return
  }
  func.func @transform_0(%arg0: i32) -> (i32, i32, i32) {
    %c0_i32 = arith.constant 0 : i32
    %c0_i32_0 = arith.constant 0 : i32
    %c0_i32_1 = arith.constant 0 : i32
    return %arg0, %c0_i32, %c0_i32_0 : i32, i32, i32
  }
  func.func @transform_1(%arg0: i32) -> (i32, i32) {
    %c0_i32 = arith.constant 0 : i32
    %c0_i32_0 = arith.constant 0 : i32
    %c0_i32_1 = arith.constant 0 : i32
    return %c0_i32, %c0_i32_0 : i32, i32
  }
  func.func @transform_2(%arg0: i32) -> (i32, i32) {
    %c0_i32 = arith.constant 0 : i32
    %c0_i32_0 = arith.constant 0 : i32
    %c0_i32_1 = arith.constant 0 : i32
    return %c0_i32, %c0_i32_0 : i32, i32
  }
  func.func @transform_3(%arg0: i32) -> (i32, i32) {
    %c0_i32 = arith.constant 0 : i32
    %c0_i32_0 = arith.constant 0 : i32
    %c0_i32_1 = arith.constant 0 : i32
    return %c0_i32, %c0_i32_0 : i32, i32
  }
  func.func @transform_4(%arg0: i32) -> (i32, i32) {
    %c0_i32 = arith.constant 0 : i32
    %c0_i32_0 = arith.constant 0 : i32
    %c0_i32_1 = arith.constant 0 : i32
    return %c0_i32, %c0_i32_0 : i32, i32
  }
  func.func @transform_5(%arg0: i32) -> (i32, i32, i32) {
    %c0_i32 = arith.constant 0 : i32
    %c0_i32_0 = arith.constant 0 : i32
    %c0_i32_1 = arith.constant 0 : i32
    return %arg0, %c0_i32, %c0_i32_0 : i32, i32, i32
  }
}

</mosaic_0001>

<llo_original>
// kernel: tpu_custom_call.1
$region0: #{tpu_custom_call.1}
  #allocation0 [shape = 'u32[]', space=smem, size = 0x4, offset = 0x4, fixed_abs, tag = 'smem constant byte address 0x4 - core index']
  #allocation1 [shape = 'u32[72,128]{1,0:T(1,128)}', space=vmem, size = 0x9000, scoped, tag = 'internal scratch']
  %s0 = inlined_call_operand.hbm [shape: f32[2,4,256], index: 0, kind: input, shape index: {}]
  %s1 = inlined_call_operand.hbm [shape: f32[4,384], index: 1, kind: input, shape index: {}]
  %s2 = inlined_call_operand.hbm [shape: f32[4,128], index: 2, kind: input, shape index: {}]
  %s3 = inlined_call_operand.hbm [shape: f32[4,3], index: 3, kind: input, shape index: {}]
  %s4 = inlined_call_operand.hbm [shape: f32[128,128], index: 4, kind: input, shape index: {}]
  %s5 = inlined_call_operand.hbm [shape: f32[2,4,256], index: 5, kind: output, shape index: {}]
  %s6 = sld [smem:[#allocation0]]
  $region73: #{tpu_custom_call.1} parent=0
    _
  %s8 = ssub.s32 1, %s6
  %s9 = scalar_select 0, %s8, %s6
  $region1: #{tpu_custom_call.1} parent=0
    #allocation2 [shape = 'u8[8192]{0}', space=vmem, size = 0x2000, scoped, tag = 'input window, operand 0']
    #allocation3 [shape = 's32[2]{0}', space=sflag, size = 0x8, scoped, tag = 'scoped memory for tpu_custom_call.1']
    #allocation4 [shape = 's32[2]{0}', space=sflag, size = 0x8, scoped, tag = 'scoped memory for tpu_custom_call.1']
    #allocation5 [shape = 'u8[6144]{0}', space=vmem, size = 0x1800, scoped, tag = 'input window, operand 1, single buffered']
    #allocation6 [shape = 's32[1]{0}', space=sflag, size = 0x4, scoped, tag = 'scoped memory for tpu_custom_call.1']
    #allocation7 [shape = 'u8[2048]{0}', space=vmem, size = 0x800, scoped, tag = 'input window, operand 2, single buffered']
    #allocation8 [shape = 'u8[2048]{0}', space=vmem, size = 0x800, scoped, tag = 'input window, operand 3, single buffered']
    #allocation9 [shape = 's32[1]{0}', space=sflag, size = 0x4, scoped, tag = 'scoped memory for tpu_custom_call.1']
    #allocation10 [shape = 'u8[65536]{0}', space=vmem, size = 0x10000, scoped, tag = 'input window, operand 4, single buffered']
    #allocation11 [shape = 'u8[8192]{0}', space=vmem, size = 0x2000, scoped, tag = 'output window, operand 0']
    %10 = vsyncpa [#allocation3], 0
    %s11 = scalar_lea.sflag [#allocation3], 1
    %12 = vsyncpa %s11, 0
    %13 = vsyncpa [#allocation6], 0
    %14 = vsyncpa [#allocation9], 0
    %15 = vsyncpa [#allocation4], 0
    %s16 = scalar_lea.sflag [#allocation4], 1
    %17 = vsyncpa %s16, 0
    loop: start=0, step=1, limit=4
    $region2: #{tpu_custom_call.1} parent=1 // loop_pre_header
      _
    $region3: #{tpu_custom_call.1} parent=1 // loop_header
      %s19 = sphi 0, %s23
      %p20 = scmp.ge.s32.totalorder %s19, 4
      %s29 = sphi 0, %s31
      %s32 = sphi 0, %s29
      %s33 = sphi 0, %s32
      %s49 = sphi 0, %s33
      %s53 = sphi 0, %s53
      %s55 = sphi 0, %s53
      %s56 = sphi 0, %s55
      %s70 = sphi 0, %s56
      %s74 = sphi 0, %s74
      %s76 = sphi 0, %s74
      %s77 = sphi 0, %s76
      %s91 = sphi 0, %s77
      %s95 = sphi 0, %s95
      %s97 = sphi 0, %s95
      %s98 = sphi 0, %s97
      %s112 = sphi 0, %s98
      %s116 = sphi 0, %s116
      %s118 = sphi 0, %s116
      %s119 = sphi 0, %s118
      %s133 = sphi 0, %s119
      %s139 = sphi 0, %s141
      %s142 = sphi 0, %s139
      %s143 = sphi 0, %s142
      %s159 = sphi 0, %s143
    $region4: #{tpu_custom_call.1} parent=1 // loop_header_branch
      %22 = sbr.rel (%p20) target = $region8
    $region5: #{tpu_custom_call.1} parent=1 // loop_body
      %s24 = ssub.s32 %s19, 1
      %s25 = ssub.s32 %s19, 2
      %s26 = sadd.s32 %s19, 1
      %s27 = ssub.s32 %s19, %s26
      %p28 = scmp.eq.s32.totalorder %s27, 0
      %s30 = sadd.s32 %s29, 1
      %s31 = scalar_select %p28, %s29, %s30
      %p34 = pneg %p28
      %p35 = scmp.eq.s32.totalorder %s19, 1
      %p36 = por %p34, %p35
      %p37 = scmp.ne.s32.totalorder %s29, %s32
      %p38 = scmp.eq.s32.totalorder %s19, 0
      %p39 = por %p37, %p38
      %p40 = scmp.ne.s32.totalorder %s29, %s32
      %p41 = scmp.eq.s32.totalorder %s24, 1
      %p42 = por %p40, %p41
      %p43 = scmp.ne.s32.totalorder %s32, %s33
      %p44 = scmp.eq.s32.totalorder %s24, 0
      %p45 = por %p43, %p44
      %p46 = scmp.ne.s32.totalorder %s32, %s33
      %p47 = scmp.eq.s32.totalorder %s25, 1
      %p48 = por %p46, %p47
      %p50 = scmp.ne.s32.totalorder %s33, %s49
      %p51 = scmp.eq.s32.totalorder %s25, 0
      %p52 = por %p50, %p51
      %s54 = sadd.s32 %s53, 1
      %p57 = scmp.eq.s32.totalorder %s19, 1
      %p58 = scmp.ne.s32.totalorder %s53, %s55
      %p59 = scmp.eq.s32.totalorder %s19, 0
      %p60 = por %p58, %p59
      %p61 = scmp.ne.s32.totalorder %s53, %s55
      %p62 = scmp.eq.s32.totalorder %s24, 1
      %p63 = por %p61, %p62
      %p64 = scmp.ne.s32.totalorder %s55, %s56
      %p65 = scmp.eq.s32.totalorder %s24, 0
      %p66 = por %p64, %p65
      %p67 = scmp.ne.s32.totalorder %s55, %s56
      %p68 = scmp.eq.s32.totalorder %s25, 1
      %p69 = por %p67, %p68
      %p71 = scmp.ne.s32.totalorder %s56, %s70
      %p72 = scmp.eq.s32.totalorder %s25, 0
      %p73 = por %p71, %p72
      %s75 = sadd.s32 %s74, 1
      %p78 = scmp.eq.s32.totalorder %s19, 1
      %p79 = scmp.ne.s32.totalorder %s74, %s76
      %p80 = scmp.eq.s32.totalorder %s19, 0
      %p81 = por %p79, %p80
      %p82 = scmp.ne.s32.totalorder %s74, %s76
      %p83 = scmp.eq.s32.totalorder %s24, 1
      %p84 = por %p82, %p83
      %p85 = scmp.ne.s32.totalorder %s76, %s77
      %p86 = scmp.eq.s32.totalorder %s24, 0
      %p87 = por %p85, %p86
      %p88 = scmp.ne.s32.totalorder %s76, %s77
      %p89 = scmp.eq.s32.totalorder %s25, 1
      %p90 = por %p88, %p89
      %p92 = scmp.ne.s32.totalorder %s77, %s91
      %p93 = scmp.eq.s32.totalorder %s25, 0
      %p94 = por %p92, %p93
      %s96 = sadd.s32 %s95, 1
      %p99 = scmp.eq.s32.totalorder %s19, 1
      %p100 = scmp.ne.s32.totalorder %s95, %s97
      %p101 = scmp.eq.s32.totalorder %s19, 0
      %p102 = por %p100, %p101
      %p103 = scmp.ne.s32.totalorder %s95, %s97
      %p104 = scmp.eq.s32.totalorder %s24, 1
      %p105 = por %p103, %p104
      %p106 = scmp.ne.s32.totalorder %s97, %s98
      %p107 = scmp.eq.s32.totalorder %s24, 0
      %p108 = por %p106, %p107
      %p109 = scmp.ne.s32.totalorder %s97, %s98
      %p110 = scmp.eq.s32.totalorder %s25, 1
      %p111 = por %p109, %p110
      %p113 = scmp.ne.s32.totalorder %s98, %s112
      %p114 = scmp.eq.s32.totalorder %s25, 0
      %p115 = por %p113, %p114
      %s117 = sadd.s32 %s116, 1
      %p120 = scmp.eq.s32.totalorder %s19, 1
      %p121 = scmp.ne.s32.totalorder %s116, %s118
      %p122 = scmp.eq.s32.totalorder %s19, 0
      %p123 = por %p121, %p122
      %p124 = scmp.ne.s32.totalorder %s116, %s118
      %p125 = scmp.eq.s32.totalorder %s24, 1
      %p126 = por %p124, %p125
      %p127 = scmp.ne.s32.totalorder %s118, %s119
      %p128 = scmp.eq.s32.totalorder %s24, 0
      %p129 = por %p127, %p128
      %p130 = scmp.ne.s32.totalorder %s118, %s119
      %p131 = scmp.eq.s32.totalorder %s25, 1
      %p132 = por %p130, %p131
      %p134 = scmp.ne.s32.totalorder %s119, %s133
      %p135 = scmp.eq.s32.totalorder %s25, 0
      %p136 = por %p134, %p135
      %s137 = ssub.s32 %s19, %s26
      %p138 = scmp.eq.s32.totalorder %s137, 0
      %s140 = sadd.s32 %s139, 1
      %s141 = scalar_select %p138, %s139, %s140
      %p144 = pneg %p138
      %p145 = scmp.eq.s32.totalorder %s19, 1
      %p146 = por %p144, %p145
      %p147 = scmp.ne.s32.totalorder %s139, %s142
      %p148 = scmp.eq.s32.totalorder %s19, 0
      %p149 = por %p147, %p148
      %p150 = scmp.ne.s32.totalorder %s139, %s142
      %p151 = scmp.eq.s32.totalorder %s24, 1
      %p152 = por %p150, %p151
      %p153 = scmp.ne.s32.totalorder %s142, %s143
      %p154 = scmp.eq.s32.totalorder %s24, 0
      %p155 = por %p153, %p154
      %p156 = scmp.ne.s32.totalorder %s142, %s143
      %p157 = scmp.eq.s32.totalorder %s25, 1
      %p158 = por %p156, %p157
      %p160 = scmp.ne.s32.totalorder %s143, %s159
      %p161 = scmp.eq.s32.totalorder %s25, 0
      %p162 = por %p160, %p161
      %p163 = scmp.le.s32.totalorder 1, %s19
      %p164 = scmp.lt.s32.totalorder %s19, 3
      %p165 = pnand %p163, %p164
      %p166 = pneg %p165
      // Predicated region
      $region9: #{tpu_custom_call.1} parent=5 // pred_check
        _
      $region10: #{tpu_custom_call.1} parent=5 // pred_check_branch
        %168 = sbr.rel (%p165) target = $region12
      $region11: #{tpu_custom_call.1} parent=5 // pred_region
        %s169 = ssub.s32 %s19, 1
        // Predicated region
        $region13: #{tpu_custom_call.1} parent=11 // pred_check
          %p170 = pneg %p66
        $region14: #{tpu_custom_call.1} parent=11 // pred_check_branch
          %172 = sbr.rel (%p170) target = $region16
        $region15: #{tpu_custom_call.1} parent=11 // pred_region
          %174 = vsyncadd [#allocation6], 0
          %s176 = sshll.u32 %s1, 4
          %s177 = int_to_ptr.hbm [resolvable:$true] %s176
          %s178 = sshll.u32 [#allocation5], 4
          %s179 = int_to_ptr.vmem [resolvable:$true] %s178
          %181 = dma.hbm_to_vmem [thread:$0]  %s177, 192, %s179, [#allocation6]
        $region16: #{tpu_custom_call.1} parent=11 // pred_fallthru
          _
        // Predicated region
        $region17: #{tpu_custom_call.1} parent=11 // pred_check
          %p182 = pneg %p87
        $region18: #{tpu_custom_call.1} parent=11 // pred_check_branch
          %184 = sbr.rel (%p182) target = $region20
        $region19: #{tpu_custom_call.1} parent=11 // pred_region
          %186 = vsyncadd [#allocation6], 0
          %s188 = sshll.u32 %s2, 4
          %s189 = int_to_ptr.hbm [resolvable:$true] %s188
          %s190 = sshll.u32 [#allocation7], 4
          %s191 = int_to_ptr.vmem [resolvable:$true] %s190
          %193 = dma.hbm_to_vmem [thread:$0]  %s189, 64, %s191, [#allocation6]
        $region20: #{tpu_custom_call.1} parent=11 // pred_fallthru
          _
        // Predicated region
        $region21: #{tpu_custom_call.1} parent=11 // pred_check
          %p194 = pneg %p108
        $region22: #{tpu_custom_call.1} parent=11 // pred_check_branch
          %196 = sbr.rel (%p194) target = $region24
        $region23: #{tpu_custom_call.1} parent=11 // pred_region
          %198 = vsyncadd [#allocation9], 0
          %s200 = sshll.u32 %s3, 4
          %s201 = int_to_ptr.hbm [resolvable:$true] %s200
          %s202 = sshll.u32 [#allocation8], 4
          %s203 = int_to_ptr.vmem [resolvable:$true] %s202
          %205 = dma.hbm_to_vmem [thread:$0]  %s201, 64, %s203, [#allocation9]
        $region24: #{tpu_custom_call.1} parent=11 // pred_fallthru
          _
        // Predicated region
        $region25: #{tpu_custom_call.1} parent=11 // pred_check
          %p206 = pneg %p129
        $region26: #{tpu_custom_call.1} parent=11 // pred_check_branch
          %208 = sbr.rel (%p206) target = $region28
        $region27: #{tpu_custom_call.1} parent=11 // pred_region
          %210 = vsyncadd [#allocation9], 0
          %s211 = sshll.u32 %s4, 4
          %s212 = int_to_ptr.hbm [resolvable:$true] %s211
          %s213 = sshll.u32 [#allocation10], 4
          %s214 = int_to_ptr.vmem [resolvable:$true] %s213
          %219 = dma.hbm_to_vmem [thread:$0]  %s212, 2048, %s214, [#allocation9], 128, 128, 8
        $region28: #{tpu_custom_call.1} parent=11 // pred_fallthru
          _
      $region12: #{tpu_custom_call.1} parent=5 // pred_fallthru
        _
      %p220 = scmp.lt.s32.totalorder %s19, 2
      // Predicated region
      $region29: #{tpu_custom_call.1} parent=5 // pred_check
        %p221 = pneg %p220
      $region30: #{tpu_custom_call.1} parent=5 // pred_check_branch
        %223 = sbr.rel (%p221) target = $region32
      $region31: #{tpu_custom_call.1} parent=5 // pred_region
        // Predicated region
        $region33: #{tpu_custom_call.1} parent=31 // pred_check
          %p224 = pneg %p39
        $region34: #{tpu_custom_call.1} parent=31 // pred_check_branch
          %226 = sbr.rel (%p224) target = $region36
        $region35: #{tpu_custom_call.1} parent=31 // pred_region
          %s227 = sand.u32 %s29, 1
          %s228 = scalar_lea.sflag [#allocation3], %s227
          %s229 = sand.u32 %s29, 1
          %s230 = smul.addr %s229, 8
          %s231 = scalar_lea.vmem [#allocation2], %s230
          %233 = vsyncadd %s228, 0
          %s234 = smul.addr %s19, 2
          %s235 = smul.addr %s234, 4
          %s236 = scalar_lea.hbm %s0, %s235
          %s238 = sshll.u32 %s236, 4
          %s239 = int_to_ptr.hbm [resolvable:$true] %s238
          %s240 = sshll.u32 %s231, 4
          %s241 = int_to_ptr.vmem [resolvable:$true] %s240
          %243 = dma.hbm_to_vmem [thread:$0]  %s239, 128, %s241, %s228
        $region36: #{tpu_custom_call.1} parent=31 // pred_fallthru
          _
      $region32: #{tpu_custom_call.1} parent=5 // pred_fallthru
        _
      %p244 = scmp.le.s32.totalorder 1, %s19
      %p245 = scmp.lt.s32.totalorder %s19, 3
      %p246 = pnand %p244, %p245
      %p247 = pneg %p246
      // Predicated region
      $region37: #{tpu_custom_call.1} parent=5 // pred_check
        _
      $region38: #{tpu_custom_call.1} parent=5 // pred_check_branch
        %249 = sbr.rel (%p246) target = $region40
      $region39: #{tpu_custom_call.1} parent=5 // pred_region
        %s250 = ssub.s32 %s19, 1
        %s251 = sand.u32 %s32, 1
        %s252 = scalar_lea.sflag [#allocation3], %s251
        %s253 = sand.u32 %s32, 1
        %s254 = smul.addr %s253, 8
        %s255 = scalar_lea.vmem [#allocation2], %s254
        // Predicated region
        $region41: #{tpu_custom_call.1} parent=39 // pred_check
          %p256 = pneg %p45
        $region42: #{tpu_custom_call.1} parent=39 // pred_check_branch
          %258 = sbr.rel (%p256) target = $region44
        $region43: #{tpu_custom_call.1} parent=39 // pred_region
          %260 = dma.done %s252, 128
        $region44: #{tpu_custom_call.1} parent=39 // pred_fallthru
          _
        // Predicated region
        $region45: #{tpu_custom_call.1} parent=39 // pred_check
          %p261 = pneg %p66
        $region46: #{tpu_custom_call.1} parent=39 // pred_check_branch
          %263 = sbr.rel (%p261) target = $region48
        $region47: #{tpu_custom_call.1} parent=39 // pred_region
          %265 = dma.done [#allocation6], 192
        $region48: #{tpu_custom_call.1} parent=39 // pred_fallthru
          _
        // Predicated region
        $region49: #{tpu_custom_call.1} parent=39 // pred_check
          %p266 = pneg %p87
        $region50: #{tpu_custom_call.1} parent=39 // pred_check_branch
          %268 = sbr.rel (%p266) target = $region52
        $region51: #{tpu_custom_call.1} parent=39 // pred_region
          %270 = dma.done [#allocation6], 64
        $region52: #{tpu_custom_call.1} parent=39 // pred_fallthru
          _
        // Predicated region
        $region53: #{tpu_custom_call.1} parent=39 // pred_check
          %p271 = pneg %p108
        $region54: #{tpu_custom_call.1} parent=39 // pred_check_branch
          %273 = sbr.rel (%p271) target = $region56
        $region55: #{tpu_custom_call.1} parent=39 // pred_region
          %275 = dma.done [#allocation9], 64
        $region56: #{tpu_custom_call.1} parent=39 // pred_fallthru
          _
        // Predicated region
        $region57: #{tpu_custom_call.1} parent=39 // pred_check
          %p276 = pneg %p129
        $region58: #{tpu_custom_call.1} parent=39 // pred_check_branch
          %278 = sbr.rel (%p276) target = $region60
        $region59: #{tpu_custom_call.1} parent=39 // pred_region
          %280 = dma.done [#allocation9], 2048
        $region60: #{tpu_custom_call.1} parent=39 // pred_fallthru
          _
        %s281 = sand.u32 %s32, 1
        %s282 = scalar_lea.sflag [#allocation3], %s281
        %s283 = sand.u32 %s32, 1
        %s284 = smul.addr %s283, 8
        %s285 = scalar_lea.vmem [#allocation2], %s284
        %p286 = pneg %p45
        %p287 = pneg %p42
        %p288 = pneg %p66
        %p289 = pneg %p63
        %p290 = pneg %p87
        %p291 = pneg %p84
        %p292 = pneg %p108
        %p293 = pneg %p105
        %p294 = pneg %p129
        %p295 = pneg %p126
        %p296 = pneg %p155
        %p297 = pneg %p152
        %s298 = sand.u32 %s142, 1
        %s299 = scalar_lea.sflag [#allocation4], %s298
        %s300 = sand.u32 %s142, 1
        %s301 = smul.addr %s300, 8
        %s302 = scalar_lea.vmem [#allocation11], %s301
        %v303 = vld [vmem:[#allocation5] sm:$0xff]
        %v304 = vld [vmem:[#allocation5 + $0x8] sm:$0xf]
        %v305 = vld [vmem:[#allocation7] sm:$0xf]
        %v306 = vld [vmem:[#allocation8] sm:$0xf]
        %v307 = vld [vmem:[#allocation10] sm:$0xff]
        %v308 = vld [vmem:[#allocation10 + $0x8] sm:$0xff]
        %v309 = vld [vmem:[#allocation10 + $0x10] sm:$0xff]
        %v310 = vld [vmem:[#allocation10 + $0x18] sm:$0xff]
        %v311 = vld [vmem:[#allocation10 + $0x20] sm:$0xff]
        %v312 = vld [vmem:[#allocation10 + $0x28] sm:$0xff]
        %v313 = vld [vmem:[#allocation10 + $0x30] sm:$0xff]
        %v314 = vld [vmem:[#allocation10 + $0x38] sm:$0xff]
        %v315 = vld [vmem:[#allocation10 + $0x40] sm:$0xff]
        %v316 = vld [vmem:[#allocation10 + $0x48] sm:$0xff]
        %v317 = vld [vmem:[#allocation10 + $0x50] sm:$0xff]
        %v318 = vld [vmem:[#allocation10 + $0x58] sm:$0xff]
        %v319 = vld [vmem:[#allocation10 + $0x60] sm:$0xff]
        %v320 = vld [vmem:[#allocation10 + $0x68] sm:$0xff]
        %v321 = vld [vmem:[#allocation10 + $0x70] sm:$0xff]
        %v322 = vld [vmem:[#allocation10 + $0x78] sm:$0xff]
        %v323 = vld [vmem:[%s255] sm:$0xff]
        %326 = vst [vmem:[#allocation1] ss:$2 sm:$0xff] %v303
        %s327 = scalar_lea.vmem [#allocation1], 16
        %328 = vst [vmem:[%s327] ss:$2 sm:$0xff] %v304
        %v329 = vld.sshfl [vmem:[#allocation1] sm:$0xff pattern:$0x75316420]
        %v330 = vld.sshfl [vmem:[#allocation1 + $0x8] sm:$0xff pattern:$0x75316420]
        %v331 = vld.sshfl [vmem:[#allocation1 + $0x10] sm:$0xff pattern:$0x75316420]
        %335 = vxpose.xlu0.b32.start [1/16] %v329, 128
        %336 = vxpose.xlu0.b32.cont [2/16] 0.0, 128
        %337 = vxpose.xlu0.b32.cont [3/16] 0.0, 128
        %338 = vxpose.xlu0.b32.cont [4/16] 0.0, 128
        %339 = vxpose.xlu0.b32.cont [5/16] 0.0, 128
        %340 = vxpose.xlu0.b32.cont [6/16] 0.0, 128
        %341 = vxpose.xlu0.b32.cont [7/16] 0.0, 128
        %342 = vxpose.xlu0.b32.cont [8/16] 0.0, 128
        %343 = vxpose.xlu0.b32.cont [9/16] 0.0, 128
        %344 = vxpose.xlu0.b32.cont [10/16] 0.0, 128
        %345 = vxpose.xlu0.b32.cont [11/16] 0.0, 128
        %346 = vxpose.xlu0.b32.cont [12/16] 0.0, 128
        %347 = vxpose.xlu0.b32.cont [13/16] 0.0, 128
        %348 = vxpose.xlu0.b32.cont [14/16] 0.0, 128
        %349 = vxpose.xlu0.b32.cont [15/16] 0.0, 128
        %350 = vxpose.xlu0.b32.end [16/16] 0.0, 128
        %v351 = vpop.trf.xlu0
        %v352 = vpop.trf.xlu0
        %v353 = vpop.trf.xlu0
        %v354 = vpop.trf.xlu0
        %v355 = vpop.trf.xlu0
        %v356 = vpop.trf.xlu0
        %v357 = vpop.trf.xlu0
        %v358 = vpop.trf.xlu0
        %v359 = vpop.trf.xlu0
        %v360 = vpop.trf.xlu0
        %v361 = vpop.trf.xlu0
        %v362 = vpop.trf.xlu0
        %v363 = vpop.trf.xlu0
        %v364 = vpop.trf.xlu0
        %v365 = vpop.trf.xlu0
        %v366 = vpop.trf.xlu0
        %367 = vxpose.xlu0.b32.start [1/16] %v330, 128
        %368 = vxpose.xlu0.b32.cont [2/16] 0.0, 128
        %369 = vxpose.xlu0.b32.cont [3/16] 0.0, 128
        %370 = vxpose.xlu0.b32.cont [4/16] 0.0, 128
        %371 = vxpose.xlu0.b32.cont [5/16] 0.0, 128
        %372 = vxpose.xlu0.b32.cont [6/16] 0.0, 128
        %373 = vxpose.xlu0.b32.cont [7/16] 0.0, 128
        %374 = vxpose.xlu0.b32.cont [8/16] 0.0, 128
        %375 = vxpose.xlu0.b32.cont [9/16] 0.0, 128
        %376 = vxpose.xlu0.b32.cont [10/16] 0.0, 128
        %377 = vxpose.xlu0.b32.cont [11/16] 0.0, 128
        %378 = vxpose.xlu0.b32.cont [12/16] 0.0, 128
        %379 = vxpose.xlu0.b32.cont [13/16] 0.0, 128
        %380 = vxpose.xlu0.b32.cont [14/16] 0.0, 128
        %381 = vxpose.xlu0.b32.cont [15/16] 0.0, 128
        %382 = vxpose.xlu0.b32.end [16/16] 0.0, 128
        %v383 = vpop.trf.xlu0
        %v384 = vpop.trf.xlu0
        %v385 = vpop.trf.xlu0
        %v386 = vpop.trf.xlu0
        %v387 = vpop.trf.xlu0
        %v388 = vpop.trf.xlu0
        %v389 = vpop.trf.xlu0
        %v390 = vpop.trf.xlu0
        %v391 = vpop.trf.xlu0
        %v392 = vpop.trf.xlu0
        %v393 = vpop.trf.xlu0
        %v394 = vpop.trf.xlu0
        %v395 = vpop.trf.xlu0
        %v396 = vpop.trf.xlu0
        %v397 = vpop.trf.xlu0
        %v398 = vpop.trf.xlu0
        %399 = vxpose.xlu0.b32.start [1/16] %v331, 128
        %400 = vxpose.xlu0.b32.cont [2/16] 0.0, 128
        %401 = vxpose.xlu0.b32.cont [3/16] 0.0, 128
        %402 = vxpose.xlu0.b32.cont [4/16] 0.0, 128
        %403 = vxpose.xlu0.b32.cont [5/16] 0.0, 128
        %404 = vxpose.xlu0.b32.cont [6/16] 0.0, 128
        %405 = vxpose.xlu0.b32.cont [7/16] 0.0, 128
        %406 = vxpose.xlu0.b32.cont [8/16] 0.0, 128
        %407 = vxpose.xlu0.b32.cont [9/16] 0.0, 128
        %408 = vxpose.xlu0.b32.cont [10/16] 0.0, 128
        %409 = vxpose.xlu0.b32.cont [11/16] 0.0, 128
        %410 = vxpose.xlu0.b32.cont [12/16] 0.0, 128
        %411 = vxpose.xlu0.b32.cont [13/16] 0.0, 128
        %412 = vxpose.xlu0.b32.cont [14/16] 0.0, 128
        %413 = vxpose.xlu0.b32.cont [15/16] 0.0, 128
        %414 = vxpose.xlu0.b32.end [16/16] 0.0, 128
        %v415 = vpop.trf.xlu0
        %v416 = vpop.trf.xlu0
        %v417 = vpop.trf.xlu0
        %v418 = vpop.trf.xlu0
        %v419 = vpop.trf.xlu0
        %v420 = vpop.trf.xlu0
        %v421 = vpop.trf.xlu0
        %v422 = vpop.trf.xlu0
        %v423 = vpop.trf.xlu0
        %v424 = vpop.trf.xlu0
        %v425 = vpop.trf.xlu0
        %v426 = vpop.trf.xlu0
        %v427 = vpop.trf.xlu0
        %v428 = vpop.trf.xlu0
        %v429 = vpop.trf.xlu0
        %v430 = vpop.trf.xlu0
        %432 = vst [vmem:[#allocation1] ss:$2 sm:$0xff] %v323
        %v433 = vld.sshfl [vmem:[#allocation1] sm:$0xff pattern:$0x75316420]
        %v434 = vld.sshfl [vmem:[#allocation1 + $0x8] sm:$0xff pattern:$0x75316420]
        %vm435 = vcmask 31744
        %v437 = vsel %vm435, %v351, 0
        %v440 = vsel %vm435, %v352, 0
        %v443 = vsel %vm435, %v353, 0
        %v446 = vsel %vm435, %v354, 0
        %v449 = vsel %vm435, %v355, 0
        %v452 = vsel %vm435, %v356, 0
        %v455 = vsel %vm435, %v357, 0
        %v458 = vsel %vm435, %v358, 0
        %v461 = vsel %vm435, %v359, 0
        %v464 = vsel %vm435, %v360, 0
        %v467 = vsel %vm435, %v361, 0
        %v470 = vsel %vm435, %v362, 0
        %v473 = vsel %vm435, %v363, 0
        %v476 = vsel %vm435, %v364, 0
        %v479 = vsel %vm435, %v365, 0
        %v482 = vsel %vm435, %v366, 0
        %v485 = vsel %vm435, %v383, 0
        %v488 = vsel %vm435, %v384, 0
        %v491 = vsel %vm435, %v385, 0
        %v494 = vsel %vm435, %v386, 0
        %v497 = vsel %vm435, %v387, 0
        %v500 = vsel %vm435, %v388, 0
        %v503 = vsel %vm435, %v389, 0
        %v506 = vsel %vm435, %v390, 0
        %v509 = vsel %vm435, %v391, 0
        %v512 = vsel %vm435, %v392, 0
        %v515 = vsel %vm435, %v393, 0
        %v518 = vsel %vm435, %v394, 0
        %v521 = vsel %vm435, %v395, 0
        %v524 = vsel %vm435, %v396, 0
        %v527 = vsel %vm435, %v397, 0
        %v530 = vsel %vm435, %v398, 0
        %v533 = vsel %vm435, %v415, 0
        %v536 = vsel %vm435, %v416, 0
        %v539 = vsel %vm435, %v417, 0
        %v542 = vsel %vm435, %v418, 0
        %v545 = vsel %vm435, %v419, 0
        %v548 = vsel %vm435, %v420, 0
        %v551 = vsel %vm435, %v421, 0
        %v554 = vsel %vm435, %v422, 0
        %v557 = vsel %vm435, %v423, 0
        %v560 = vsel %vm435, %v424, 0
        %v563 = vsel %vm435, %v425, 0
        %v566 = vsel %vm435, %v426, 0
        %v569 = vsel %vm435, %v427, 0
        %v572 = vsel %vm435, %v428, 0
        %v575 = vsel %vm435, %v429, 0
        %v578 = vsel %vm435, %v430, 0
        %vm580 = vcmask 1043456
        %v581 = vsel %vm580, %v433, 0
        %v583 = vsel %vm580, %v434, 0
        %585 = vmatpush.msra.mxu0 0.0
        %586 = vmatpush.msra.mxu0 0.0
        %587 = vmatpush.msra.mxu0 0.0
        %588 = vmatpush.msra.mxu0 0.0
        %589 = vmatpush.msra.mxu0 0.0
        %590 = vmatpush.msra.mxu0 0.0
        %591 = vmatpush.msra.mxu0 0.0
        %592 = vmatpush.msra.mxu0 0.0
        %593 = vmatpush.msra.mxu0 0.0
        %594 = vmatpush.msra.mxu0 0.0
        %595 = vmatpush.msra.mxu0 0.0
        %596 = vmatpush.msra.mxu0 0.0
        %597 = vmatpush.msra.mxu0 0.0
        %598 = vmatpush.msra.mxu0 0.0
        %599 = vmatpush.msra.mxu0 0.0
        %600 = vmatpush.msra.mxu0 %v581
        %601 = vmatmul.f32.gmra.mxu0 %v437
        %v602 = vpop.f32.mrf.mxu0
        %v603 = vadd.f32 0.0, %v602
        %604 = vmatmul.f32.gmra.mxu0 %v440
        %v605 = vpop.f32.mrf.mxu0
        %v606 = vadd.f32 0.0, %v605
        %607 = vmatmul.f32.gmra.mxu0 %v443
        %v608 = vpop.f32.mrf.mxu0
        %v609 = vadd.f32 0.0, %v608
        %610 = vmatmul.f32.gmra.mxu0 %v446
        %v611 = vpop.f32.mrf.mxu0
        %v612 = vadd.f32 0.0, %v611
        %613 = vmatmul.f32.gmra.mxu0 %v449
        %v614 = vpop.f32.mrf.mxu0
        %v615 = vadd.f32 0.0, %v614
        %616 = vmatmul.f32.gmra.mxu0 %v452
        %v617 = vpop.f32.mrf.mxu0
        %v618 = vadd.f32 0.0, %v617
        %619 = vmatmul.f32.gmra.mxu0 %v455
        %v620 = vpop.f32.mrf.mxu0
        %v621 = vadd.f32 0.0, %v620
        %622 = vmatmul.f32.gmra.mxu0 %v458
        %v623 = vpop.f32.mrf.mxu0
        %v624 = vadd.f32 0.0, %v623
        %625 = vmatmul.f32.gmra.mxu0 %v461
        %v626 = vpop.f32.mrf.mxu0
        %v627 = vadd.f32 0.0, %v626
        %628 = vmatmul.f32.gmra.mxu0 %v464
        %v629 = vpop.f32.mrf.mxu0
        %v630 = vadd.f32 0.0, %v629
        %631 = vmatmul.f32.gmra.mxu0 %v467
        %v632 = vpop.f32.mrf.mxu0
        %v633 = vadd.f32 0.0, %v632
        %634 = vmatmul.f32.gmra.mxu0 %v470
        %v635 = vpop.f32.mrf.mxu0
        %v636 = vadd.f32 0.0, %v635
        %637 = vmatmul.f32.gmra.mxu0 %v473
        %v638 = vpop.f32.mrf.mxu0
        %v639 = vadd.f32 0.0, %v638
        %640 = vmatmul.f32.gmra.mxu0 %v476
        %v641 = vpop.f32.mrf.mxu0
        %v642 = vadd.f32 0.0, %v641
        %643 = vmatmul.f32.gmra.mxu0 %v479
        %v644 = vpop.f32.mrf.mxu0
        %v645 = vadd.f32 0.0, %v644
        %646 = vmatmul.f32.gmra.mxu0 %v482
        %v647 = vpop.f32.mrf.mxu0
        %v648 = vadd.f32 0.0, %v647
        %649 = vmatmul.f32.gmra.mxu0 %v485
        %v650 = vpop.f32.mrf.mxu0
        %v651 = vadd.f32 0.0, %v650
        %652 = vmatmul.f32.gmra.mxu0 %v488
        %v653 = vpop.f32.mrf.mxu0
        %v654 = vadd.f32 0.0, %v653
        %655 = vmatmul.f32.gmra.mxu0 %v491
        %v656 = vpop.f32.mrf.mxu0
        %v657 = vadd.f32 0.0, %v656
        %658 = vmatmul.f32.gmra.mxu0 %v494
        %v659 = vpop.f32.mrf.mxu0
        %v660 = vadd.f32 0.0, %v659
        %661 = vmatmul.f32.gmra.mxu0 %v497
        %v662 = vpop.f32.mrf.mxu0
        %v663 = vadd.f32 0.0, %v662
        %664 = vmatmul.f32.gmra.mxu0 %v500
        %v665 = vpop.f32.mrf.mxu0
        %v666 = vadd.f32 0.0, %v665
        %667 = vmatmul.f32.gmra.mxu0 %v503
        %v668 = vpop.f32.mrf.mxu0
        %v669 = vadd.f32 0.0, %v668
        %670 = vmatmul.f32.gmra.mxu0 %v506
        %v671 = vpop.f32.mrf.mxu0
        %v672 = vadd.f32 0.0, %v671
        %673 = vmatmul.f32.gmra.mxu0 %v509
        %v674 = vpop.f32.mrf.mxu0
        %v675 = vadd.f32 0.0, %v674
        %676 = vmatmul.f32.gmra.mxu0 %v512
        %v677 = vpop.f32.mrf.mxu0
        %v678 = vadd.f32 0.0, %v677
        %679 = vmatmul.f32.gmra.mxu0 %v515
        %v680 = vpop.f32.mrf.mxu0
        %v681 = vadd.f32 0.0, %v680
        %682 = vmatmul.f32.gmra.mxu0 %v518
        %v683 = vpop.f32.mrf.mxu0
        %v684 = vadd.f32 0.0, %v683
        %685 = vmatmul.f32.gmra.mxu0 %v521
        %v686 = vpop.f32.mrf.mxu0
        %v687 = vadd.f32 0.0, %v686
        %688 = vmatmul.f32.gmra.mxu0 %v524
        %v689 = vpop.f32.mrf.mxu0
        %v690 = vadd.f32 0.0, %v689
        %691 = vmatmul.f32.gmra.mxu0 %v527
        %v692 = vpop.f32.mrf.mxu0
        %v693 = vadd.f32 0.0, %v692
        %694 = vmatmul.f32.gmra.mxu0 %v530
        %v695 = vpop.f32.mrf.mxu0
        %v696 = vadd.f32 0.0, %v695
        %697 = vmatmul.f32.gmra.mxu0 %v533
        %v698 = vpop.f32.mrf.mxu0
        %v699 = vadd.f32 0.0, %v698
        %700 = vmatmul.f32.gmra.mxu0 %v536
        %v701 = vpop.f32.mrf.mxu0
        %v702 = vadd.f32 0.0, %v701
        %703 = vmatmul.f32.gmra.mxu0 %v539
        %v704 = vpop.f32.mrf.mxu0
        %v705 = vadd.f32 0.0, %v704
        %706 = vmatmul.f32.gmra.mxu0 %v542
        %v707 = vpop.f32.mrf.mxu0
        %v708 = vadd.f32 0.0, %v707
        %709 = vmatmul.f32.gmra.mxu0 %v545
        %v710 = vpop.f32.mrf.mxu0
        %v711 = vadd.f32 0.0, %v710
        %712 = vmatmul.f32.gmra.mxu0 %v548
        %v713 = vpop.f32.mrf.mxu0
        %v714 = vadd.f32 0.0, %v713
        %715 = vmatmul.f32.gmra.mxu0 %v551
        %v716 = vpop.f32.mrf.mxu0
        %v717 = vadd.f32 0.0, %v716
        %718 = vmatmul.f32.gmra.mxu0 %v554
        %v719 = vpop.f32.mrf.mxu0
        %v720 = vadd.f32 0.0, %v719
        %721 = vmatmul.f32.gmra.mxu0 %v557
        %v722 = vpop.f32.mrf.mxu0
        %v723 = vadd.f32 0.0, %v722
        %724 = vmatmul.f32.gmra.mxu0 %v560
        %v725 = vpop.f32.mrf.mxu0
        %v726 = vadd.f32 0.0, %v725
        %727 = vmatmul.f32.gmra.mxu0 %v563
        %v728 = vpop.f32.mrf.mxu0
        %v729 = vadd.f32 0.0, %v728
        %730 = vmatmul.f32.gmra.mxu0 %v566
        %v731 = vpop.f32.mrf.mxu0
        %v732 = vadd.f32 0.0, %v731
        %733 = vmatmul.f32.gmra.mxu0 %v569
        %v734 = vpop.f32.mrf.mxu0
        %v735 = vadd.f32 0.0, %v734
        %736 = vmatmul.f32.gmra.mxu0 %v572
        %v737 = vpop.f32.mrf.mxu0
        %v738 = vadd.f32 0.0, %v737
        %739 = vmatmul.f32.gmra.mxu0 %v575
        %v740 = vpop.f32.mrf.mxu0
        %v741 = vadd.f32 0.0, %v740
        %742 = vmatmul.f32.gmra.mxu0 %v578
        %v743 = vpop.f32.mrf.mxu0
        %v744 = vadd.f32 0.0, %v743
        %745 = vdwg.mxu0
        %746 = vmatpush.msra.mxu0 0.0
        %747 = vmatpush.msra.mxu0 0.0
        %748 = vmatpush.msra.mxu0 0.0
        %749 = vmatpush.msra.mxu0 0.0
        %750 = vmatpush.msra.mxu0 0.0
        %751 = vmatpush.msra.mxu0 0.0
        %752 = vmatpush.msra.mxu0 0.0
        %753 = vmatpush.msra.mxu0 0.0
        %754 = vmatpush.msra.mxu0 0.0
        %755 = vmatpush.msra.mxu0 0.0
        %756 = vmatpush.msra.mxu0 0.0
        %757 = vmatpush.msra.mxu0 0.0
        %758 = vmatpush.msra.mxu0 0.0
        %759 = vmatpush.msra.mxu0 0.0
        %760 = vmatpush.msra.mxu0 0.0
        %761 = vmatpush.msra.mxu0 %v583
        %762 = vmatmul.f32.gmra.mxu0 %v437
        %v763 = vpop.f32.mrf.mxu0
        %v764 = vadd.f32 0.0, %v763
        %765 = vmatmul.f32.gmra.mxu0 %v440
        %v766 = vpop.f32.mrf.mxu0
        %v767 = vadd.f32 0.0, %v766
        %768 = vmatmul.f32.gmra.mxu0 %v443
        %v769 = vpop.f32.mrf.mxu0
        %v770 = vadd.f32 0.0, %v769
        %771 = vmatmul.f32.gmra.mxu0 %v446
        %v772 = vpop.f32.mrf.mxu0
        %v773 = vadd.f32 0.0, %v772
        %774 = vmatmul.f32.gmra.mxu0 %v449
        %v775 = vpop.f32.mrf.mxu0
        %v776 = vadd.f32 0.0, %v775
        %777 = vmatmul.f32.gmra.mxu0 %v452
        %v778 = vpop.f32.mrf.mxu0
        %v779 = vadd.f32 0.0, %v778
        %780 = vmatmul.f32.gmra.mxu0 %v455
        %v781 = vpop.f32.mrf.mxu0
        %v782 = vadd.f32 0.0, %v781
        %783 = vmatmul.f32.gmra.mxu0 %v458
        %v784 = vpop.f32.mrf.mxu0
        %v785 = vadd.f32 0.0, %v784
        %786 = vmatmul.f32.gmra.mxu0 %v461
        %v787 = vpop.f32.mrf.mxu0
        %v788 = vadd.f32 0.0, %v787
        %789 = vmatmul.f32.gmra.mxu0 %v464
        %v790 = vpop.f32.mrf.mxu0
        %v791 = vadd.f32 0.0, %v790
        %792 = vmatmul.f32.gmra.mxu0 %v467
        %v793 = vpop.f32.mrf.mxu0
        %v794 = vadd.f32 0.0, %v793
        %795 = vmatmul.f32.gmra.mxu0 %v470
        %v796 = vpop.f32.mrf.mxu0
        %v797 = vadd.f32 0.0, %v796
        %798 = vmatmul.f32.gmra.mxu0 %v473
        %v799 = vpop.f32.mrf.mxu0
        %v800 = vadd.f32 0.0, %v799
        %801 = vmatmul.f32.gmra.mxu0 %v476
        %v802 = vpop.f32.mrf.mxu0
        %v803 = vadd.f32 0.0, %v802
        %804 = vmatmul.f32.gmra.mxu0 %v479
        %v805 = vpop.f32.mrf.mxu0
        %v806 = vadd.f32 0.0, %v805
        %807 = vmatmul.f32.gmra.mxu0 %v482
        %v808 = vpop.f32.mrf.mxu0
        %v809 = vadd.f32 0.0, %v808
        %810 = vmatmul.f32.gmra.mxu0 %v485
        %v811 = vpop.f32.mrf.mxu0
        %v812 = vadd.f32 0.0, %v811
        %813 = vmatmul.f32.gmra.mxu0 %v488
        %v814 = vpop.f32.mrf.mxu0
        %v815 = vadd.f32 0.0, %v814
        %816 = vmatmul.f32.gmra.mxu0 %v491
        %v817 = vpop.f32.mrf.mxu0
        %v818 = vadd.f32 0.0, %v817
        %819 = vmatmul.f32.gmra.mxu0 %v494
        %v820 = vpop.f32.mrf.mxu0
        %v821 = vadd.f32 0.0, %v820
        %822 = vmatmul.f32.gmra.mxu0 %v497
        %v823 = vpop.f32.mrf.mxu0
        %v824 = vadd.f32 0.0, %v823
        %825 = vmatmul.f32.gmra.mxu0 %v500
        %v826 = vpop.f32.mrf.mxu0
        %v827 = vadd.f32 0.0, %v826
        %828 = vmatmul.f32.gmra.mxu0 %v503
        %v829 = vpop.f32.mrf.mxu0
        %v830 = vadd.f32 0.0, %v829
        %831 = vmatmul.f32.gmra.mxu0 %v506
        %v832 = vpop.f32.mrf.mxu0
        %v833 = vadd.f32 0.0, %v832
        %834 = vmatmul.f32.gmra.mxu0 %v509
        %v835 = vpop.f32.mrf.mxu0
        %v836 = vadd.f32 0.0, %v835
        %837 = vmatmul.f32.gmra.mxu0 %v512
        %v838 = vpop.f32.mrf.mxu0
        %v839 = vadd.f32 0.0, %v838
        %840 = vmatmul.f32.gmra.mxu0 %v515
        %v841 = vpop.f32.mrf.mxu0
        %v842 = vadd.f32 0.0, %v841
        %843 = vmatmul.f32.gmra.mxu0 %v518
        %v844 = vpop.f32.mrf.mxu0
        %v845 = vadd.f32 0.0, %v844
        %846 = vmatmul.f32.gmra.mxu0 %v521
        %v847 = vpop.f32.mrf.mxu0
        %v848 = vadd.f32 0.0, %v847
        %849 = vmatmul.f32.gmra.mxu0 %v524
        %v850 = vpop.f32.mrf.mxu0
        %v851 = vadd.f32 0.0, %v850
        %852 = vmatmul.f32.gmra.mxu0 %v527
        %v853 = vpop.f32.mrf.mxu0
        %v854 = vadd.f32 0.0, %v853
        %855 = vmatmul.f32.gmra.mxu0 %v530
        %v856 = vpop.f32.mrf.mxu0
        %v857 = vadd.f32 0.0, %v856
        %858 = vmatmul.f32.gmra.mxu0 %v533
        %v859 = vpop.f32.mrf.mxu0
        %v860 = vadd.f32 0.0, %v859
        %861 = vmatmul.f32.gmra.mxu0 %v536
        %v862 = vpop.f32.mrf.mxu0
        %v863 = vadd.f32 0.0, %v862
        %864 = vmatmul.f32.gmra.mxu0 %v539
        %v865 = vpop.f32.mrf.mxu0
        %v866 = vadd.f32 0.0, %v865
        %867 = vmatmul.f32.gmra.mxu0 %v542
        %v868 = vpop.f32.mrf.mxu0
        %v869 = vadd.f32 0.0, %v868
        %870 = vmatmul.f32.gmra.mxu0 %v545
        %v871 = vpop.f32.mrf.mxu0
        %v872 = vadd.f32 0.0, %v871
        %873 = vmatmul.f32.gmra.mxu0 %v548
        %v874 = vpop.f32.mrf.mxu0
        %v875 = vadd.f32 0.0, %v874
        %876 = vmatmul.f32.gmra.mxu0 %v551
        %v877 = vpop.f32.mrf.mxu0
        %v878 = vadd.f32 0.0, %v877
        %879 = vmatmul.f32.gmra.mxu0 %v554
        %v880 = vpop.f32.mrf.mxu0
        %v881 = vadd.f32 0.0, %v880
        %882 = vmatmul.f32.gmra.mxu0 %v557
        %v883 = vpop.f32.mrf.mxu0
        %v884 = vadd.f32 0.0, %v883
        %885 = vmatmul.f32.gmra.mxu0 %v560
        %v886 = vpop.f32.mrf.mxu0
        %v887 = vadd.f32 0.0, %v886
        %888 = vmatmul.f32.gmra.mxu0 %v563
        %v889 = vpop.f32.mrf.mxu0
        %v890 = vadd.f32 0.0, %v889
        %891 = vmatmul.f32.gmra.mxu0 %v566
        %v892 = vpop.f32.mrf.mxu0
        %v893 = vadd.f32 0.0, %v892
        %894 = vmatmul.f32.gmra.mxu0 %v569
        %v895 = vpop.f32.mrf.mxu0
        %v896 = vadd.f32 0.0, %v895
        %897 = vmatmul.f32.gmra.mxu0 %v572
        %v898 = vpop.f32.mrf.mxu0
        %v899 = vadd.f32 0.0, %v898
        %900 = vmatmul.f32.gmra.mxu0 %v575
        %v901 = vpop.f32.mrf.mxu0
        %v902 = vadd.f32 0.0, %v901
        %903 = vmatmul.f32.gmra.mxu0 %v578
        %v904 = vpop.f32.mrf.mxu0
        %v905 = vadd.f32 0.0, %v904
        %906 = vdwg.mxu0
        %v907 = vmax.f32 %v651, %v812
        %908 = vmax.xlane.f32.xlu0 %v907
        %v909 = vpop.xlane.xlu0 %908
        %v910 = vmax.f32 %v654, %v815
        %911 = vmax.xlane.f32.xlu0 %v910
        %v912 = vpop.xlane.xlu0 %911
        %v913 = vmax.f32 %v657, %v818
        %914 = vmax.xlane.f32.xlu0 %v913
        %v915 = vpop.xlane.xlu0 %914
        %v916 = vmax.f32 %v660, %v821
        %917 = vmax.xlane.f32.xlu0 %v916
        %v918 = vpop.xlane.xlu0 %917
        %v919 = vmax.f32 %v663, %v824
        %920 = vmax.xlane.f32.xlu0 %v919
        %v921 = vpop.xlane.xlu0 %920
        %v922 = vmax.f32 %v666, %v827
        %923 = vmax.xlane.f32.xlu0 %v922
        %v924 = vpop.xlane.xlu0 %923
        %v925 = vmax.f32 %v669, %v830
        %926 = vmax.xlane.f32.xlu0 %v925
        %v927 = vpop.xlane.xlu0 %926
        %v928 = vmax.f32 %v672, %v833
        %929 = vmax.xlane.f32.xlu0 %v928
        %v930 = vpop.xlane.xlu0 %929
        %v931 = vmax.f32 %v675, %v836
        %932 = vmax.xlane.f32.xlu0 %v931
        %v933 = vpop.xlane.xlu0 %932
        %v934 = vmax.f32 %v678, %v839
        %935 = vmax.xlane.f32.xlu0 %v934
        %v936 = vpop.xlane.xlu0 %935
        %v937 = vmax.f32 %v681, %v842
        %938 = vmax.xlane.f32.xlu0 %v937
        %v939 = vpop.xlane.xlu0 %938
        %v940 = vmax.f32 %v684, %v845
        %941 = vmax.xlane.f32.xlu0 %v940
        %v942 = vpop.xlane.xlu0 %941
        %v943 = vmax.f32 %v687, %v848
        %944 = vmax.xlane.f32.xlu0 %v943
        %v945 = vpop.xlane.xlu0 %944
        %v946 = vmax.f32 %v690, %v851
        %947 = vmax.xlane.f32.xlu0 %v946
        %v948 = vpop.xlane.xlu0 %947
        %v949 = vmax.f32 %v693, %v854
        %950 = vmax.xlane.f32.xlu0 %v949
        %v951 = vpop.xlane.xlu0 %950
        %v952 = vmax.f32 %v696, %v857
        %953 = vmax.xlane.f32.xlu0 %v952
        %v954 = vpop.xlane.xlu0 %953
        %v955 = vsub.f32 %v651, %v909
        %v956 = vsub.f32 %v812, %v909
        %v957 = vsub.f32 %v654, %v912
        %v958 = vsub.f32 %v815, %v912
        %v959 = vsub.f32 %v657, %v915
        %v960 = vsub.f32 %v818, %v915
        %v961 = vsub.f32 %v660, %v918
        %v962 = vsub.f32 %v821, %v918
        %v963 = vsub.f32 %v663, %v921
        %v964 = vsub.f32 %v824, %v921
        %v965 = vsub.f32 %v666, %v924
        %v966 = vsub.f32 %v827, %v924
        %v967 = vsub.f32 %v669, %v927
        %v968 = vsub.f32 %v830, %v927
        %v969 = vsub.f32 %v672, %v930
        %v970 = vsub.f32 %v833, %v930
        %v971 = vsub.f32 %v675, %v933
        %v972 = vsub.f32 %v836, %v933
        %v973 = vsub.f32 %v678, %v936
        %v974 = vsub.f32 %v839, %v936
        %v975 = vsub.f32 %v681, %v939
        %v976 = vsub.f32 %v842, %v939
        %v977 = vsub.f32 %v684, %v942
        %v978 = vsub.f32 %v845, %v942
        %v979 = vsub.f32 %v687, %v945
        %v980 = vsub.f32 %v848, %v945
        %v981 = vsub.f32 %v690, %v948
        %v982 = vsub.f32 %v851, %v948
        %v983 = vsub.f32 %v693, %v951
        %v984 = vsub.f32 %v854, %v951
        %v985 = vsub.f32 %v696, %v954
        %v986 = vsub.f32 %v857, %v954
        %v987 = vmul.f32 %v955, 1.442695
        %v988 = vpow.pop %v987
        %v989 = vmul.f32 %v956, 1.442695
        %v990 = vpow.pop %v989
        %v991 = vmul.f32 %v957, 1.442695
        %v992 = vpow.pop %v991
        %v993 = vmul.f32 %v958, 1.442695
        %v994 = vpow.pop %v993
        %v995 = vmul.f32 %v959, 1.442695
        %v996 = vpow.pop %v995
        %v997 = vmul.f32 %v960, 1.442695
        %v998 = vpow.pop %v997
        %v999 = vmul.f32 %v961, 1.442695
        %v1000 = vpow.pop %v999
        %v1001 = vmul.f32 %v962, 1.442695
        %v1002 = vpow.pop %v1001
        %v1003 = vmul.f32 %v963, 1.442695
        %v1004 = vpow.pop %v1003
        %v1005 = vmul.f32 %v964, 1.442695
        %v1006 = vpow.pop %v1005
        %v1007 = vmul.f32 %v965, 1.442695
        %v1008 = vpow.pop %v1007
        %v1009 = vmul.f32 %v966, 1.442695
        %v1010 = vpow.pop %v1009
        %v1011 = vmul.f32 %v967, 1.442695
        %v1012 = vpow.pop %v1011
        %v1013 = vmul.f32 %v968, 1.442695
        %v1014 = vpow.pop %v1013
        %v1015 = vmul.f32 %v969, 1.442695
        %v1016 = vpow.pop %v1015
        %v1017 = vmul.f32 %v970, 1.442695
        %v1018 = vpow.pop %v1017
        %v1019 = vmul.f32 %v971, 1.442695
        %v1020 = vpow.pop %v1019
        %v1021 = vmul.f32 %v972, 1.442695
        %v1022 = vpow.pop %v1021
        %v1023 = vmul.f32 %v973, 1.442695
        %v1024 = vpow.pop %v1023
        %v1025 = vmul.f32 %v974, 1.442695
        %v1026 = vpow.pop %v1025
        %v1027 = vmul.f32 %v975, 1.442695
        %v1028 = vpow.pop %v1027
        %v1029 = vmul.f32 %v976, 1.442695
        %v1030 = vpow.pop %v1029
        %v1031 = vmul.f32 %v977, 1.442695
        %v1032 = vpow.pop %v1031
        %v1033 = vmul.f32 %v978, 1.442695
        %v1034 = vpow.pop %v1033
        %v1035 = vmul.f32 %v979, 1.442695
        %v1036 = vpow.pop %v1035
        %v1037 = vmul.f32 %v980, 1.442695
        %v1038 = vpow.pop %v1037
        %v1039 = vmul.f32 %v981, 1.442695
        %v1040 = vpow.pop %v1039
        %v1041 = vmul.f32 %v982, 1.442695
        %v1042 = vpow.pop %v1041
        %v1043 = vmul.f32 %v983, 1.442695
        %v1044 = vpow.pop %v1043
        %v1045 = vmul.f32 %v984, 1.442695
        %v1046 = vpow.pop %v1045
        %v1047 = vmul.f32 %v985, 1.442695
        %v1048 = vpow.pop %v1047
        %v1049 = vmul.f32 %v986, 1.442695
        %v1050 = vpow.pop %v1049
        %v1051 = vadd.f32 %v988, %v990
        %1052 = vadd.xlane.f32.xlu0 %v1051
        %v1053 = vpop.xlane.xlu0 %1052
        %v1054 = vadd.f32 %v992, %v994
        %1055 = vadd.xlane.f32.xlu0 %v1054
        %v1056 = vpop.xlane.xlu0 %1055
        %v1057 = vadd.f32 %v996, %v998
        %1058 = vadd.xlane.f32.xlu0 %v1057
        %v1059 = vpop.xlane.xlu0 %1058
        %v1060 = vadd.f32 %v1000, %v1002
        %1061 = vadd.xlane.f32.xlu0 %v1060
        %v1062 = vpop.xlane.xlu0 %1061
        %v1063 = vadd.f32 %v1004, %v1006
        %1064 = vadd.xlane.f32.xlu0 %v1063
        %v1065 = vpop.xlane.xlu0 %1064
        %v1066 = vadd.f32 %v1008, %v1010
        %1067 = vadd.xlane.f32.xlu0 %v1066
        %v1068 = vpop.xlane.xlu0 %1067
        %v1069 = vadd.f32 %v1012, %v1014
        %1070 = vadd.xlane.f32.xlu0 %v1069
        %v1071 = vpop.xlane.xlu0 %1070
        %v1072 = vadd.f32 %v1016, %v1018
        %1073 = vadd.xlane.f32.xlu0 %v1072
        %v1074 = vpop.xlane.xlu0 %1073
        %v1075 = vadd.f32 %v1020, %v1022
        %1076 = vadd.xlane.f32.xlu0 %v1075
        %v1077 = vpop.xlane.xlu0 %1076
        %v1078 = vadd.f32 %v1024, %v1026
        %1079 = vadd.xlane.f32.xlu0 %v1078
        %v1080 = vpop.xlane.xlu0 %1079
        %v1081 = vadd.f32 %v1028, %v1030
        %1082 = vadd.xlane.f32.xlu0 %v1081
        %v1083 = vpop.xlane.xlu0 %1082
        %v1084 = vadd.f32 %v1032, %v1034
        %1085 = vadd.xlane.f32.xlu0 %v1084
        %v1086 = vpop.xlane.xlu0 %1085
        %v1087 = vadd.f32 %v1036, %v1038
        %1088 = vadd.xlane.f32.xlu0 %v1087
        %v1089 = vpop.xlane.xlu0 %1088
        %v1090 = vadd.f32 %v1040, %v1042
        %1091 = vadd.xlane.f32.xlu0 %v1090
        %v1092 = vpop.xlane.xlu0 %1091
        %v1093 = vadd.f32 %v1044, %v1046
        %1094 = vadd.xlane.f32.xlu0 %v1093
        %v1095 = vpop.xlane.xlu0 %1094
        %v1096 = vadd.f32 %v1048, %v1050
        %1097 = vadd.xlane.f32.xlu0 %v1096
        %v1098 = vpop.xlane.xlu0 %1097
        %v1099 = vrcp.pop %v1053
        %v1100 = vrcp.pop %v1056
        %v1101 = vrcp.pop %v1059
        %v1102 = vrcp.pop %v1062
        %v1103 = vrcp.pop %v1065
        %v1104 = vrcp.pop %v1068
        %v1105 = vrcp.pop %v1071
        %v1106 = vrcp.pop %v1074
        %v1107 = vrcp.pop %v1077
        %v1108 = vrcp.pop %v1080
        %v1109 = vrcp.pop %v1083
        %v1110 = vrcp.pop %v1086
        %v1111 = vrcp.pop %v1089
        %v1112 = vrcp.pop %v1092
        %v1113 = vrcp.pop %v1095
        %v1114 = vrcp.pop %v1098
        %v1115 = vmul.f32 %v1053, %v1099
        %v1116 = vmul.f32 %v1056, %v1100
        %v1117 = vmul.f32 %v1059, %v1101
        %v1118 = vmul.f32 %v1062, %v1102
        %v1119 = vmul.f32 %v1065, %v1103
        %v1120 = vmul.f32 %v1068, %v1104
        %v1121 = vmul.f32 %v1071, %v1105
        %v1122 = vmul.f32 %v1074, %v1106
        %v1123 = vmul.f32 %v1077, %v1107
        %v1124 = vmul.f32 %v1080, %v1108
        %v1125 = vmul.f32 %v1083, %v1109
        %v1126 = vmul.f32 %v1086, %v1110
        %v1127 = vmul.f32 %v1089, %v1111
        %v1128 = vmul.f32 %v1092, %v1112
        %v1129 = vmul.f32 %v1095, %v1113
        %v1130 = vmul.f32 %v1098, %v1114
        %v1131 = vsub.f32 2.0, %v1115
        %v1132 = vsub.f32 2.0, %v1116
        %v1133 = vsub.f32 2.0, %v1117
        %v1134 = vsub.f32 2.0, %v1118
        %v1135 = vsub.f32 2.0, %v1119
        %v1136 = vsub.f32 2.0, %v1120
        %v1137 = vsub.f32 2.0, %v1121
        %v1138 = vsub.f32 2.0, %v1122
        %v1139 = vsub.f32 2.0, %v1123
        %v1140 = vsub.f32 2.0, %v1124
        %v1141 = vsub.f32 2.0, %v1125
        %v1142 = vsub.f32 2.0, %v1126
        %v1143 = vsub.f32 2.0, %v1127
        %v1144 = vsub.f32 2.0, %v1128
        %v1145 = vsub.f32 2.0, %v1129
        %v1146 = vsub.f32 2.0, %v1130
        %v1147 = vmul.f32 %v1099, %v1131
        %v1148 = vmul.f32 %v1100, %v1132
        %v1149 = vmul.f32 %v1101, %v1133
        %v1150 = vmul.f32 %v1102, %v1134
        %v1151 = vmul.f32 %v1103, %v1135
        %v1152 = vmul.f32 %v1104, %v1136
        %v1153 = vmul.f32 %v1105, %v1137
        %v1154 = vmul.f32 %v1106, %v1138
        %v1155 = vmul.f32 %v1107, %v1139
        %v1156 = vmul.f32 %v1108, %v1140
        %v1157 = vmul.f32 %v1109, %v1141
        %v1158 = vmul.f32 %v1110, %v1142
        %v1159 = vmul.f32 %v1111, %v1143
        %v1160 = vmul.f32 %v1112, %v1144
        %v1161 = vmul.f32 %v1113, %v1145
        %v1162 = vmul.f32 %v1114, %v1146
        %v1163 = vmul.f32 %v988, %v1147
        %v1164 = vmul.f32 %v990, %v1147
        %v1165 = vmul.f32 %v992, %v1148
        %v1166 = vmul.f32 %v994, %v1148
        %v1167 = vmul.f32 %v996, %v1149
        %v1168 = vmul.f32 %v998, %v1149
        %v1169 = vmul.f32 %v1000, %v1150
        %v1170 = vmul.f32 %v1002, %v1150
        %v1171 = vmul.f32 %v1004, %v1151
        %v1172 = vmul.f32 %v1006, %v1151
        %v1173 = vmul.f32 %v1008, %v1152
        %v1174 = vmul.f32 %v1010, %v1152
        %v1175 = vmul.f32 %v1012, %v1153
        %v1176 = vmul.f32 %v1014, %v1153
        %v1177 = vmul.f32 %v1016, %v1154
        %v1178 = vmul.f32 %v1018, %v1154
        %v1179 = vmul.f32 %v1020, %v1155
        %v1180 = vmul.f32 %v1022, %v1155
        %v1181 = vmul.f32 %v1024, %v1156
        %v1182 = vmul.f32 %v1026, %v1156
        %v1183 = vmul.f32 %v1028, %v1157
        %v1184 = vmul.f32 %v1030, %v1157
        %v1185 = vmul.f32 %v1032, %v1158
        %v1186 = vmul.f32 %v1034, %v1158
        %v1187 = vmul.f32 %v1036, %v1159
        %v1188 = vmul.f32 %v1038, %v1159
        %v1189 = vmul.f32 %v1040, %v1160
        %v1190 = vmul.f32 %v1042, %v1160
        %v1191 = vmul.f32 %v1044, %v1161
        %v1192 = vmul.f32 %v1046, %v1161
        %v1193 = vmul.f32 %v1048, %v1162
        %v1194 = vmul.f32 %v1050, %v1162
        %1195 = vmatpush.xpose.msra.mxu0 %v744
        %1196 = vmatpush.xpose.msra.mxu0 %v741
        %1197 = vmatpush.xpose.msra.mxu0 %v738
        %1198 = vmatpush.xpose.msra.mxu0 %v735
        %1199 = vmatpush.xpose.msra.mxu0 %v732
        %1200 = vmatpush.xpose.msra.mxu0 %v729
        %1201 = vmatpush.xpose.msra.mxu0 %v726
        %1202 = vmatpush.xpose.msra.mxu0 %v723
        %1203 = vmatpush.xpose.msra.mxu0 %v720
        %1204 = vmatpush.xpose.msra.mxu0 %v717
        %1205 = vmatpush.xpose.msra.mxu0 %v714
        %1206 = vmatpush.xpose.msra.mxu0 %v711
        %1207 = vmatpush.xpose.msra.mxu0 %v708
        %1208 = vmatpush.xpose.msra.mxu0 %v705
        %1209 = vmatpush.xpose.msra.mxu0 %v702
        %1210 = vmatpush.xpose.msra.mxu0 %v699
        %1211 = vmatmul.f32.gmra.mxu0 %v1163
        %v1212 = vpop.f32.mrf.mxu0
        %v1213 = vadd.f32 0.0, %v1212
        %1214 = vmatmul.f32.gmra.mxu0 %v1165
        %v1215 = vpop.f32.mrf.mxu0
        %v1216 = vadd.f32 0.0, %v1215
        %1217 = vmatmul.f32.gmra.mxu0 %v1167
        %v1218 = vpop.f32.mrf.mxu0
        %v1219 = vadd.f32 0.0, %v1218
        %1220 = vmatmul.f32.gmra.mxu0 %v1169
        %v1221 = vpop.f32.mrf.mxu0
        %v1222 = vadd.f32 0.0, %v1221
        %1223 = vmatmul.f32.gmra.mxu0 %v1171
        %v1224 = vpop.f32.mrf.mxu0
        %v1225 = vadd.f32 0.0, %v1224
        %1226 = vmatmul.f32.gmra.mxu0 %v1173
        %v1227 = vpop.f32.mrf.mxu0
        %v1228 = vadd.f32 0.0, %v1227
        %1229 = vmatmul.f32.gmra.mxu0 %v1175
        %v1230 = vpop.f32.mrf.mxu0
        %v1231 = vadd.f32 0.0, %v1230
        %1232 = vmatmul.f32.gmra.mxu0 %v1177
        %v1233 = vpop.f32.mrf.mxu0
        %v1234 = vadd.f32 0.0, %v1233
        %1235 = vmatmul.f32.gmra.mxu0 %v1179
        %v1236 = vpop.f32.mrf.mxu0
        %v1237 = vadd.f32 0.0, %v1236
        %1238 = vmatmul.f32.gmra.mxu0 %v1181
        %v1239 = vpop.f32.mrf.mxu0
        %v1240 = vadd.f32 0.0, %v1239
        %1241 = vmatmul.f32.gmra.mxu0 %v1183
        %v1242 = vpop.f32.mrf.mxu0
        %v1243 = vadd.f32 0.0, %v1242
        %1244 = vmatmul.f32.gmra.mxu0 %v1185
        %v1245 = vpop.f32.mrf.mxu0
        %v1246 = vadd.f32 0.0, %v1245
        %1247 = vmatmul.f32.gmra.mxu0 %v1187
        %v1248 = vpop.f32.mrf.mxu0
        %v1249 = vadd.f32 0.0, %v1248
        %1250 = vmatmul.f32.gmra.mxu0 %v1189
        %v1251 = vpop.f32.mrf.mxu0
        %v1252 = vadd.f32 0.0, %v1251
        %1253 = vmatmul.f32.gmra.mxu0 %v1191
        %v1254 = vpop.f32.mrf.mxu0
        %v1255 = vadd.f32 0.0, %v1254
        %1256 = vmatmul.f32.gmra.mxu0 %v1193
        %v1257 = vpop.f32.mrf.mxu0
        %v1258 = vadd.f32 0.0, %v1257
        %1259 = vdwg.mxu0
        %1260 = vmatpush.xpose.msra.mxu0 %v905
        %1261 = vmatpush.xpose.msra.mxu0 %v902
        %1262 = vmatpush.xpose.msra.mxu0 %v899
        %1263 = vmatpush.xpose.msra.mxu0 %v896
        %1264 = vmatpush.xpose.msra.mxu0 %v893
        %1265 = vmatpush.xpose.msra.mxu0 %v890
        %1266 = vmatpush.xpose.msra.mxu0 %v887
        %1267 = vmatpush.xpose.msra.mxu0 %v884
        %1268 = vmatpush.xpose.msra.mxu0 %v881
        %1269 = vmatpush.xpose.msra.mxu0 %v878
        %1270 = vmatpush.xpose.msra.mxu0 %v875
        %1271 = vmatpush.xpose.msra.mxu0 %v872
        %1272 = vmatpush.xpose.msra.mxu0 %v869
        %1273 = vmatpush.xpose.msra.mxu0 %v866
        %1274 = vmatpush.xpose.msra.mxu0 %v863
        %1275 = vmatpush.xpose.msra.mxu0 %v860
        %1276 = vmatmul.f32.gmra.mxu0 %v1164
        %v1277 = vpop.f32.mrf.mxu0
        %v1278 = vadd.f32 %v1213, %v1277
        %1279 = vmatmul.f32.gmra.mxu0 %v1166
        %v1280 = vpop.f32.mrf.mxu0
        %v1281 = vadd.f32 %v1216, %v1280
        %1282 = vmatmul.f32.gmra.mxu0 %v1168
        %v1283 = vpop.f32.mrf.mxu0
        %v1284 = vadd.f32 %v1219, %v1283
        %1285 = vmatmul.f32.gmra.mxu0 %v1170
        %v1286 = vpop.f32.mrf.mxu0
        %v1287 = vadd.f32 %v1222, %v1286
        %1288 = vmatmul.f32.gmra.mxu0 %v1172
        %v1289 = vpop.f32.mrf.mxu0
        %v1290 = vadd.f32 %v1225, %v1289
        %1291 = vmatmul.f32.gmra.mxu0 %v1174
        %v1292 = vpop.f32.mrf.mxu0
        %v1293 = vadd.f32 %v1228, %v1292
        %1294 = vmatmul.f32.gmra.mxu0 %v1176
        %v1295 = vpop.f32.mrf.mxu0
        %v1296 = vadd.f32 %v1231, %v1295
        %1297 = vmatmul.f32.gmra.mxu0 %v1178
        %v1298 = vpop.f32.mrf.mxu0
        %v1299 = vadd.f32 %v1234, %v1298
        %1300 = vmatmul.f32.gmra.mxu0 %v1180
        %v1301 = vpop.f32.mrf.mxu0
        %v1302 = vadd.f32 %v1237, %v1301
        %1303 = vmatmul.f32.gmra.mxu0 %v1182
        %v1304 = vpop.f32.mrf.mxu0
        %v1305 = vadd.f32 %v1240, %v1304
        %1306 = vmatmul.f32.gmra.mxu0 %v1184
        %v1307 = vpop.f32.mrf.mxu0
        %v1308 = vadd.f32 %v1243, %v1307
        %1309 = vmatmul.f32.gmra.mxu0 %v1186
        %v1310 = vpop.f32.mrf.mxu0
        %v1311 = vadd.f32 %v1246, %v1310
        %1312 = vmatmul.f32.gmra.mxu0 %v1188
        %v1313 = vpop.f32.mrf.mxu0
        %v1314 = vadd.f32 %v1249, %v1313
        %1315 = vmatmul.f32.gmra.mxu0 %v1190
        %v1316 = vpop.f32.mrf.mxu0
        %v1317 = vadd.f32 %v1252, %v1316
        %1318 = vmatmul.f32.gmra.mxu0 %v1192
        %v1319 = vpop.f32.mrf.mxu0
        %v1320 = vadd.f32 %v1255, %v1319
        %1321 = vmatmul.f32.gmra.mxu0 %v1194
        %v1322 = vpop.f32.mrf.mxu0
        %v1323 = vadd.f32 %v1258, %v1322
        %1324 = vdwg.mxu0
        %v1325 = vmul.f32 %v1278, %v307
        %v1326 = vmul.f32 %v1281, %v308
        %v1327 = vmul.f32 %v1284, %v309
        %v1328 = vmul.f32 %v1287, %v310
        %v1329 = vmul.f32 %v1290, %v311
        %v1330 = vmul.f32 %v1293, %v312
        %v1331 = vmul.f32 %v1296, %v313
        %v1332 = vmul.f32 %v1299, %v314
        %v1333 = vmul.f32 %v1302, %v315
        %v1334 = vmul.f32 %v1305, %v316
        %v1335 = vmul.f32 %v1308, %v317
        %v1336 = vmul.f32 %v1311, %v318
        %v1337 = vmul.f32 %v1314, %v319
        %v1338 = vmul.f32 %v1317, %v320
        %v1339 = vmul.f32 %v1320, %v321
        %v1340 = vmul.f32 %v1323, %v322
        %1341 = vmatpush.xpose.msra.mxu0 %v1340
        %1342 = vmatpush.xpose.msra.mxu0 %v1339
        %1343 = vmatpush.xpose.msra.mxu0 %v1338
        %1344 = vmatpush.xpose.msra.mxu0 %v1337
        %1345 = vmatpush.xpose.msra.mxu0 %v1336
        %1346 = vmatpush.xpose.msra.mxu0 %v1335
        %1347 = vmatpush.xpose.msra.mxu0 %v1334
        %1348 = vmatpush.xpose.msra.mxu0 %v1333
        %1349 = vmatpush.xpose.msra.mxu0 %v1332
        %1350 = vmatpush.xpose.msra.mxu0 %v1331
        %1351 = vmatpush.xpose.msra.mxu0 %v1330
        %1352 = vmatpush.xpose.msra.mxu0 %v1329
        %1353 = vmatpush.xpose.msra.mxu0 %v1328
        %1354 = vmatpush.xpose.msra.mxu0 %v1327
        %1355 = vmatpush.xpose.msra.mxu0 %v1326
        %1356 = vmatpush.xpose.msra.mxu0 %v1325
        %1357 = vmatmul.f32.gmra.mxu0 %v305
        %v1358 = vpop.f32.mrf.mxu0
        %v1359 = vadd.f32 0.0, %v1358
        %1360 = vdwg.mxu0
        %v1361 = vmul.f32 %v1359, 0.17677669
        %v1362 = vmax.f32 %v603, %v609
        %v1363 = vmax.f32 %v606, %v612
        %v1364 = vmax.f32 %v1362, %v615
        %v1365 = vmax.f32 %v1363, %v618
        %v1366 = vmax.f32 %v1364, %v621
        %v1367 = vmax.f32 %v1365, %v624
        %v1368 = vmax.f32 %v1366, %v627
        %v1369 = vmax.f32 %v1367, %v630
        %v1370 = vmax.f32 %v1368, %v633
        %v1371 = vmax.f32 %v1369, %v636
        %v1372 = vmax.f32 %v1370, %v639
        %v1373 = vmax.f32 %v1371, %v642
        %v1374 = vmax.f32 %v1372, %v645
        %v1375 = vmax.f32 %v1373, %v648
        %v1376 = vmax.f32 %v1374, %v1375
        %v1377 = vrot.slane %v1376, 4
        %v1378 = vmax.f32 %v1376, %v1377
        %v1379 = vrot.slane %v1378, 2
        %v1380 = vmax.f32 %v1378, %v1379
        %v1381 = vrot.slane %v1380, 1
        %v1382 = vmax.f32 %v1380, %v1381
        %v1383 = vmax.f32 %v764, %v770
        %v1384 = vmax.f32 %v767, %v773
        %v1385 = vmax.f32 %v1383, %v776
        %v1386 = vmax.f32 %v1384, %v779
        %v1387 = vmax.f32 %v1385, %v782
        %v1388 = vmax.f32 %v1386, %v785
        %v1389 = vmax.f32 %v1387, %v788
        %v1390 = vmax.f32 %v1388, %v791
        %v1391 = vmax.f32 %v1389, %v794
        %v1392 = vmax.f32 %v1390, %v797
        %v1393 = vmax.f32 %v1391, %v800
        %v1394 = vmax.f32 %v1392, %v803
        %v1395 = vmax.f32 %v1393, %v806
        %v1396 = vmax.f32 %v1394, %v809
        %v1397 = vmax.f32 %v1395, %v1396
        %v1398 = vrot.slane %v1397, 4
        %v1399 = vmax.f32 %v1397, %v1398
        %v1400 = vrot.slane %v1399, 2
        %v1401 = vmax.f32 %v1399, %v1400
        %v1402 = vrot.slane %v1401, 1
        %v1403 = vmax.f32 %v1401, %v1402
        %v1404 = vsub.f32 %v603, %v1382
        %v1405 = vsub.f32 %v764, %v1403
        %v1406 = vsub.f32 %v606, %v1382
        %v1407 = vsub.f32 %v767, %v1403
        %v1408 = vsub.f32 %v609, %v1382
        %v1409 = vsub.f32 %v770, %v1403
        %v1410 = vsub.f32 %v612, %v1382
        %v1411 = vsub.f32 %v773, %v1403
        %v1412 = vsub.f32 %v615, %v1382
        %v1413 = vsub.f32 %v776, %v1403
        %v1414 = vsub.f32 %v618, %v1382
        %v1415 = vsub.f32 %v779, %v1403
        %v1416 = vsub.f32 %v621, %v1382
        %v1417 = vsub.f32 %v782, %v1403
        %v1418 = vsub.f32 %v624, %v1382
        %v1419 = vsub.f32 %v785, %v1403
        %v1420 = vsub.f32 %v627, %v1382
        %v1421 = vsub.f32 %v788, %v1403
        %v1422 = vsub.f32 %v630, %v1382
        %v1423 = vsub.f32 %v791, %v1403
        %v1424 = vsub.f32 %v633, %v1382
        %v1425 = vsub.f32 %v794, %v1403
        %v1426 = vsub.f32 %v636, %v1382
        %v1427 = vsub.f32 %v797, %v1403
        %v1428 = vsub.f32 %v639, %v1382
        %v1429 = vsub.f32 %v800, %v1403
        %v1430 = vsub.f32 %v642, %v1382
        %v1431 = vsub.f32 %v803, %v1403
        %v1432 = vsub.f32 %v645, %v1382
        %v1433 = vsub.f32 %v806, %v1403
        %v1434 = vsub.f32 %v648, %v1382
        %v1435 = vsub.f32 %v809, %v1403
        %v1436 = vmul.f32 %v1404, 1.442695
        %v1437 = vpow.pop %v1436
        %v1438 = vmul.f32 %v1405, 1.442695
        %v1439 = vpow.pop %v1438
        %v1440 = vmul.f32 %v1406, 1.442695
        %v1441 = vpow.pop %v1440
        %v1442 = vmul.f32 %v1407, 1.442695
        %v1443 = vpow.pop %v1442
        %v1444 = vmul.f32 %v1408, 1.442695
        %v1445 = vpow.pop %v1444
        %v1446 = vmul.f32 %v1409, 1.442695
        %v1447 = vpow.pop %v1446
        %v1448 = vmul.f32 %v1410, 1.442695
        %v1449 = vpow.pop %v1448
        %v1450 = vmul.f32 %v1411, 1.442695
        %v1451 = vpow.pop %v1450
        %v1452 = vmul.f32 %v1412, 1.442695
        %v1453 = vpow.pop %v1452
        %v1454 = vmul.f32 %v1413, 1.442695
        %v1455 = vpow.pop %v1454
        %v1456 = vmul.f32 %v1414, 1.442695
        %v1457 = vpow.pop %v1456
        %v1458 = vmul.f32 %v1415, 1.442695
        %v1459 = vpow.pop %v1458
        %v1460 = vmul.f32 %v1416, 1.442695
        %v1461 = vpow.pop %v1460
        %v1462 = vmul.f32 %v1417, 1.442695
        %v1463 = vpow.pop %v1462
        %v1464 = vmul.f32 %v1418, 1.442695
        %v1465 = vpow.pop %v1464
        %v1466 = vmul.f32 %v1419, 1.442695
        %v1467 = vpow.pop %v1466
        %v1468 = vmul.f32 %v1420, 1.442695
        %v1469 = vpow.pop %v1468
        %v1470 = vmul.f32 %v1421, 1.442695
        %v1471 = vpow.pop %v1470
        %v1472 = vmul.f32 %v1422, 1.442695
        %v1473 = vpow.pop %v1472
        %v1474 = vmul.f32 %v1423, 1.442695
        %v1475 = vpow.pop %v1474
        %v1476 = vmul.f32 %v1424, 1.442695
        %v1477 = vpow.pop %v1476
        %v1478 = vmul.f32 %v1425, 1.442695
        %v1479 = vpow.pop %v1478
        %v1480 = vmul.f32 %v1426, 1.442695
        %v1481 = vpow.pop %v1480
        %v1482 = vmul.f32 %v1427, 1.442695
        %v1483 = vpow.pop %v1482
        %v1484 = vmul.f32 %v1428, 1.442695
        %v1485 = vpow.pop %v1484
        %v1486 = vmul.f32 %v1429, 1.442695
        %v1487 = vpow.pop %v1486
        %v1488 = vmul.f32 %v1430, 1.442695
        %v1489 = vpow.pop %v1488
        %v1490 = vmul.f32 %v1431, 1.442695
        %v1491 = vpow.pop %v1490
        %v1492 = vmul.f32 %v1432, 1.442695
        %v1493 = vpow.pop %v1492
        %v1494 = vmul.f32 %v1433, 1.442695
        %v1495 = vpow.pop %v1494
        %v1496 = vmul.f32 %v1434, 1.442695
        %v1497 = vpow.pop %v1496
        %v1498 = vmul.f32 %v1435, 1.442695
        %v1499 = vpow.pop %v1498
        %1500 = vmatpush.msra.mxu0 %v1497
        %1501 = vmatpush.msra.mxu0 %v1493
        %1502 = vmatpush.msra.mxu0 %v1489
        %1503 = vmatpush.msra.mxu0 %v1485
        %1504 = vmatpush.msra.mxu0 %v1481
        %1505 = vmatpush.msra.mxu0 %v1477
        %1506 = vmatpush.msra.mxu0 %v1473
        %1507 = vmatpush.msra.mxu0 %v1469
        %1508 = vmatpush.msra.mxu0 %v1465
        %1509 = vmatpush.msra.mxu0 %v1461
        %1510 = vmatpush.msra.mxu0 %v1457
        %1511 = vmatpush.msra.mxu0 %v1453
        %1512 = vmatpush.msra.mxu0 %v1449
        %1513 = vmatpush.msra.mxu0 %v1445
        %1514 = vmatpush.msra.mxu0 %v1441
        %1515 = vmatpush.msra.mxu0 %v1437
        %1516 = vmatmul.f32.gmra.mxu0 %v307
        %v1517 = vpop.f32.mrf.mxu0
        %v1518 = vadd.f32 0.0, %v1517
        %1519 = vmatmul.f32.gmra.mxu0 %v308
        %v1520 = vpop.f32.mrf.mxu0
        %v1521 = vadd.f32 0.0, %v1520
        %1522 = vmatmul.f32.gmra.mxu0 %v309
        %v1523 = vpop.f32.mrf.mxu0
        %v1524 = vadd.f32 0.0, %v1523
        %1525 = vmatmul.f32.gmra.mxu0 %v310
        %v1526 = vpop.f32.mrf.mxu0
        %v1527 = vadd.f32 0.0, %v1526
        %1528 = vmatmul.f32.gmra.mxu0 %v311
        %v1529 = vpop.f32.mrf.mxu0
        %v1530 = vadd.f32 0.0, %v1529
        %1531 = vmatmul.f32.gmra.mxu0 %v312
        %v1532 = vpop.f32.mrf.mxu0
        %v1533 = vadd.f32 0.0, %v1532
        %1534 = vmatmul.f32.gmra.mxu0 %v313
        %v1535 = vpop.f32.mrf.mxu0
        %v1536 = vadd.f32 0.0, %v1535
        %1537 = vmatmul.f32.gmra.mxu0 %v314
        %v1538 = vpop.f32.mrf.mxu0
        %v1539 = vadd.f32 0.0, %v1538
        %1540 = vmatmul.f32.gmra.mxu0 %v315
        %v1541 = vpop.f32.mrf.mxu0
        %v1542 = vadd.f32 0.0, %v1541
        %1543 = vmatmul.f32.gmra.mxu0 %v316
        %v1544 = vpop.f32.mrf.mxu0
        %v1545 = vadd.f32 0.0, %v1544
        %1546 = vmatmul.f32.gmra.mxu0 %v317
        %v1547 = vpop.f32.mrf.mxu0
        %v1548 = vadd.f32 0.0, %v1547
        %1549 = vmatmul.f32.gmra.mxu0 %v318
        %v1550 = vpop.f32.mrf.mxu0
        %v1551 = vadd.f32 0.0, %v1550
        %1552 = vmatmul.f32.gmra.mxu0 %v319
        %v1553 = vpop.f32.mrf.mxu0
        %v1554 = vadd.f32 0.0, %v1553
        %1555 = vmatmul.f32.gmra.mxu0 %v320
        %v1556 = vpop.f32.mrf.mxu0
        %v1557 = vadd.f32 0.0, %v1556
        %1558 = vmatmul.f32.gmra.mxu0 %v321
        %v1559 = vpop.f32.mrf.mxu0
        %v1560 = vadd.f32 0.0, %v1559
        %1561 = vmatmul.f32.gmra.mxu0 %v322
        %v1562 = vpop.f32.mrf.mxu0
        %v1563 = vadd.f32 0.0, %v1562
        %1564 = vdwg.mxu0
        %1565 = vmatpush.msra.mxu0 %v1499
        %1566 = vmatpush.msra.mxu0 %v1495
        %1567 = vmatpush.msra.mxu0 %v1491
        %1568 = vmatpush.msra.mxu0 %v1487
        %1569 = vmatpush.msra.mxu0 %v1483
        %1570 = vmatpush.msra.mxu0 %v1479
        %1571 = vmatpush.msra.mxu0 %v1475
        %1572 = vmatpush.msra.mxu0 %v1471
        %1573 = vmatpush.msra.mxu0 %v1467
        %1574 = vmatpush.msra.mxu0 %v1463
        %1575 = vmatpush.msra.mxu0 %v1459
        %1576 = vmatpush.msra.mxu0 %v1455
        %1577 = vmatpush.msra.mxu0 %v1451
        %1578 = vmatpush.msra.mxu0 %v1447
        %1579 = vmatpush.msra.mxu0 %v1443
        %1580 = vmatpush.msra.mxu0 %v1439
        %1581 = vmatmul.f32.gmra.mxu0 %v307
        %v1582 = vpop.f32.mrf.mxu0
        %v1583 = vadd.f32 0.0, %v1582
        %1584 = vmatmul.f32.gmra.mxu0 %v308
        %v1585 = vpop.f32.mrf.mxu0
        %v1586 = vadd.f32 0.0, %v1585
        %1587 = vmatmul.f32.gmra.mxu0 %v309
        %v1588 = vpop.f32.mrf.mxu0
        %v1589 = vadd.f32 0.0, %v1588
        %1590 = vmatmul.f32.gmra.mxu0 %v310
        %v1591 = vpop.f32.mrf.mxu0
        %v1592 = vadd.f32 0.0, %v1591
        %1593 = vmatmul.f32.gmra.mxu0 %v311
        %v1594 = vpop.f32.mrf.mxu0
        %v1595 = vadd.f32 0.0, %v1594
        %1596 = vmatmul.f32.gmra.mxu0 %v312
        %v1597 = vpop.f32.mrf.mxu0
        %v1598 = vadd.f32 0.0, %v1597
        %1599 = vmatmul.f32.gmra.mxu0 %v313
        %v1600 = vpop.f32.mrf.mxu0
        %v1601 = vadd.f32 0.0, %v1600
        %1602 = vmatmul.f32.gmra.mxu0 %v314
        %v1603 = vpop.f32.mrf.mxu0
        %v1604 = vadd.f32 0.0, %v1603
        %1605 = vmatmul.f32.gmra.mxu0 %v315
        %v1606 = vpop.f32.mrf.mxu0
        %v1607 = vadd.f32 0.0, %v1606
        %1608 = vmatmul.f32.gmra.mxu0 %v316
        %v1609 = vpop.f32.mrf.mxu0
        %v1610 = vadd.f32 0.0, %v1609
        %1611 = vmatmul.f32.gmra.mxu0 %v317
        %v1612 = vpop.f32.mrf.mxu0
        %v1613 = vadd.f32 0.0, %v1612
        %1614 = vmatmul.f32.gmra.mxu0 %v318
        %v1615 = vpop.f32.mrf.mxu0
        %v1616 = vadd.f32 0.0, %v1615
        %1617 = vmatmul.f32.gmra.mxu0 %v319
        %v1618 = vpop.f32.mrf.mxu0
        %v1619 = vadd.f32 0.0, %v1618
        %1620 = vmatmul.f32.gmra.mxu0 %v320
        %v1621 = vpop.f32.mrf.mxu0
        %v1622 = vadd.f32 0.0, %v1621
        %1623 = vmatmul.f32.gmra.mxu0 %v321
        %v1624 = vpop.f32.mrf.mxu0
        %v1625 = vadd.f32 0.0, %v1624
        %1626 = vmatmul.f32.gmra.mxu0 %v322
        %v1627 = vpop.f32.mrf.mxu0
        %v1628 = vadd.f32 0.0, %v1627
        %1629 = vdwg.mxu0
        %v1630 = vrcp.pop %v1518
        %v1631 = vrcp.pop %v1583
        %v1632 = vrcp.pop %v1521
        %v1633 = vrcp.pop %v1586
        %v1634 = vrcp.pop %v1524
        %v1635 = vrcp.pop %v1589
        %v1636 = vrcp.pop %v1527
        %v1637 = vrcp.pop %v1592
        %v1638 = vrcp.pop %v1530
        %v1639 = vrcp.pop %v1595
        %v1640 = vrcp.pop %v1533
        %v1641 = vrcp.pop %v1598
        %v1642 = vrcp.pop %v1536
        %v1643 = vrcp.pop %v1601
        %v1644 = vrcp.pop %v1539
        %v1645 = vrcp.pop %v1604
        %v1646 = vrcp.pop %v1542
        %v1647 = vrcp.pop %v1607
        %v1648 = vrcp.pop %v1545
        %v1649 = vrcp.pop %v1610
        %v1650 = vrcp.pop %v1548
        %v1651 = vrcp.pop %v1613
        %v1652 = vrcp.pop %v1551
        %v1653 = vrcp.pop %v1616
        %v1654 = vrcp.pop %v1554
        %v1655 = vrcp.pop %v1619
        %v1656 = vrcp.pop %v1557
        %v1657 = vrcp.pop %v1622
        %v1658 = vrcp.pop %v1560
        %v1659 = vrcp.pop %v1625
        %v1660 = vrcp.pop %v1563
        %v1661 = vrcp.pop %v1628
        %v1662 = vmul.f32 %v1518, %v1630
        %v1663 = vmul.f32 %v1583, %v1631
        %v1664 = vmul.f32 %v1521, %v1632
        %v1665 = vmul.f32 %v1586, %v1633
        %v1666 = vmul.f32 %v1524, %v1634
        %v1667 = vmul.f32 %v1589, %v1635
        %v1668 = vmul.f32 %v1527, %v1636
        %v1669 = vmul.f32 %v1592, %v1637
        %v1670 = vmul.f32 %v1530, %v1638
        %v1671 = vmul.f32 %v1595, %v1639
        %v1672 = vmul.f32 %v1533, %v1640
        %v1673 = vmul.f32 %v1598, %v1641
        %v1674 = vmul.f32 %v1536, %v1642
        %v1675 = vmul.f32 %v1601, %v1643
        %v1676 = vmul.f32 %v1539, %v1644
        %v1677 = vmul.f32 %v1604, %v1645
        %v1678 = vmul.f32 %v1542, %v1646
        %v1679 = vmul.f32 %v1607, %v1647
        %v1680 = vmul.f32 %v1545, %v1648
        %v1681 = vmul.f32 %v1610, %v1649
        %v1682 = vmul.f32 %v1548, %v1650
        %v1683 = vmul.f32 %v1613, %v1651
        %v1684 = vmul.f32 %v1551, %v1652
        %v1685 = vmul.f32 %v1616, %v1653
        %v1686 = vmul.f32 %v1554, %v1654
        %v1687 = vmul.f32 %v1619, %v1655
        %v1688 = vmul.f32 %v1557, %v1656
        %v1689 = vmul.f32 %v1622, %v1657
        %v1690 = vmul.f32 %v1560, %v1658
        %v1691 = vmul.f32 %v1625, %v1659
        %v1692 = vmul.f32 %v1563, %v1660
        %v1693 = vmul.f32 %v1628, %v1661
        %v1694 = vsub.f32 2.0, %v1662
        %v1695 = vsub.f32 2.0, %v1663
        %v1696 = vsub.f32 2.0, %v1664
        %v1697 = vsub.f32 2.0, %v1665
        %v1698 = vsub.f32 2.0, %v1666
        %v1699 = vsub.f32 2.0, %v1667
        %v1700 = vsub.f32 2.0, %v1668
        %v1701 = vsub.f32 2.0, %v1669
        %v1702 = vsub.f32 2.0, %v1670
        %v1703 = vsub.f32 2.0, %v1671
        %v1704 = vsub.f32 2.0, %v1672
        %v1705 = vsub.f32 2.0, %v1673
        %v1706 = vsub.f32 2.0, %v1674
        %v1707 = vsub.f32 2.0, %v1675
        %v1708 = vsub.f32 2.0, %v1676
        %v1709 = vsub.f32 2.0, %v1677
        %v1710 = vsub.f32 2.0, %v1678
        %v1711 = vsub.f32 2.0, %v1679
        %v1712 = vsub.f32 2.0, %v1680
        %v1713 = vsub.f32 2.0, %v1681
        %v1714 = vsub.f32 2.0, %v1682
        %v1715 = vsub.f32 2.0, %v1683
        %v1716 = vsub.f32 2.0, %v1684
        %v1717 = vsub.f32 2.0, %v1685
        %v1718 = vsub.f32 2.0, %v1686
        %v1719 = vsub.f32 2.0, %v1687
        %v1720 = vsub.f32 2.0, %v1688
        %v1721 = vsub.f32 2.0, %v1689
        %v1722 = vsub.f32 2.0, %v1690
        %v1723 = vsub.f32 2.0, %v1691
        %v1724 = vsub.f32 2.0, %v1692
        %v1725 = vsub.f32 2.0, %v1693
        %v1726 = vmul.f32 %v1630, %v1694
        %v1727 = vmul.f32 %v1631, %v1695
        %v1728 = vmul.f32 %v1632, %v1696
        %v1729 = vmul.f32 %v1633, %v1697
        %v1730 = vmul.f32 %v1634, %v1698
        %v1731 = vmul.f32 %v1635, %v1699
        %v1732 = vmul.f32 %v1636, %v1700
        %v1733 = vmul.f32 %v1637, %v1701
        %v1734 = vmul.f32 %v1638, %v1702
        %v1735 = vmul.f32 %v1639, %v1703
        %v1736 = vmul.f32 %v1640, %v1704
        %v1737 = vmul.f32 %v1641, %v1705
        %v1738 = vmul.f32 %v1642, %v1706
        %v1739 = vmul.f32 %v1643, %v1707
        %v1740 = vmul.f32 %v1644, %v1708
        %v1741 = vmul.f32 %v1645, %v1709
        %v1742 = vmul.f32 %v1646, %v1710
        %v1743 = vmul.f32 %v1647, %v1711
        %v1744 = vmul.f32 %v1648, %v1712
        %v1745 = vmul.f32 %v1649, %v1713
        %v1746 = vmul.f32 %v1650, %v1714
        %v1747 = vmul.f32 %v1651, %v1715
        %v1748 = vmul.f32 %v1652, %v1716
        %v1749 = vmul.f32 %v1653, %v1717
        %v1750 = vmul.f32 %v1654, %v1718
        %v1751 = vmul.f32 %v1655, %v1719
        %v1752 = vmul.f32 %v1656, %v1720
        %v1753 = vmul.f32 %v1657, %v1721
        %v1754 = vmul.f32 %v1658, %v1722
        %v1755 = vmul.f32 %v1659, %v1723
        %v1756 = vmul.f32 %v1660, %v1724
        %v1757 = vmul.f32 %v1661, %v1725
        %v1758 = vmul.f32 %v1437, %v1726
        %v1759 = vmul.f32 %v1439, %v1727
        %v1760 = vmul.f32 %v1441, %v1728
        %v1761 = vmul.f32 %v1443, %v1729
        %v1762 = vmul.f32 %v1445, %v1730
        %v1763 = vmul.f32 %v1447, %v1731
        %v1764 = vmul.f32 %v1449, %v1732
        %v1765 = vmul.f32 %v1451, %v1733
        %v1766 = vmul.f32 %v1453, %v1734
        %v1767 = vmul.f32 %v1455, %v1735
        %v1768 = vmul.f32 %v1457, %v1736
        %v1769 = vmul.f32 %v1459, %v1737
        %v1770 = vmul.f32 %v1461, %v1738
        %v1771 = vmul.f32 %v1463, %v1739
        %v1772 = vmul.f32 %v1465, %v1740
        %v1773 = vmul.f32 %v1467, %v1741
        %v1774 = vmul.f32 %v1469, %v1742
        %v1775 = vmul.f32 %v1471, %v1743
        %v1776 = vmul.f32 %v1473, %v1744
        %v1777 = vmul.f32 %v1475, %v1745
        %v1778 = vmul.f32 %v1477, %v1746
        %v1779 = vmul.f32 %v1479, %v1747
        %v1780 = vmul.f32 %v1481, %v1748
        %v1781 = vmul.f32 %v1483, %v1749
        %v1782 = vmul.f32 %v1485, %v1750
        %v1783 = vmul.f32 %v1487, %v1751
        %v1784 = vmul.f32 %v1489, %v1752
        %v1785 = vmul.f32 %v1491, %v1753
        %v1786 = vmul.f32 %v1493, %v1754
        %v1787 = vmul.f32 %v1495, %v1755
        %v1788 = vmul.f32 %v1497, %v1756
        %v1789 = vmul.f32 %v1499, %v1757
        %1791 = vset.pattern.permute.xlu0 0
        %1792 = vperm.xlu0 %1791, %v306
        %v1793 = vpop.permute.xlu0 %1792
        %1795 = vmatpush.msra.mxu0 %v1788
        %1796 = vmatpush.msra.mxu0 %v1786
        %1797 = vmatpush.msra.mxu0 %v1784
        %1798 = vmatpush.msra.mxu0 %v1782
        %1799 = vmatpush.msra.mxu0 %v1780
        %1800 = vmatpush.msra.mxu0 %v1778
        %1801 = vmatpush.msra.mxu0 %v1776
        %1802 = vmatpush.msra.mxu0 %v1774
        %1803 = vmatpush.msra.mxu0 %v1772
        %1804 = vmatpush.msra.mxu0 %v1770
        %1805 = vmatpush.msra.mxu0 %v1768
        %1806 = vmatpush.msra.mxu0 %v1766
        %1807 = vmatpush.msra.mxu0 %v1764
        %1808 = vmatpush.msra.mxu0 %v1762
        %1809 = vmatpush.msra.mxu0 %v1760
        %1810 = vmatpush.msra.mxu0 %v1758
        %1811 = vmatmul.f32.gmra.mxu0 %v1361
        %v1812 = vpop.f32.mrf.mxu0
        %v1813 = vadd.f32 %v1793, %v1812
        %1814 = vdwg.mxu0
        %1815 = vmatpush.msra.mxu0 %v1789
        %1816 = vmatpush.msra.mxu0 %v1787
        %1817 = vmatpush.msra.mxu0 %v1785
        %1818 = vmatpush.msra.mxu0 %v1783
        %1819 = vmatpush.msra.mxu0 %v1781
        %1820 = vmatpush.msra.mxu0 %v1779
        %1821 = vmatpush.msra.mxu0 %v1777
        %1822 = vmatpush.msra.mxu0 %v1775
        %1823 = vmatpush.msra.mxu0 %v1773
        %1824 = vmatpush.msra.mxu0 %v1771
        %1825 = vmatpush.msra.mxu0 %v1769
        %1826 = vmatpush.msra.mxu0 %v1767
        %1827 = vmatpush.msra.mxu0 %v1765
        %1828 = vmatpush.msra.mxu0 %v1763
        %1829 = vmatpush.msra.mxu0 %v1761
        %1830 = vmatpush.msra.mxu0 %v1759
        %1831 = vmatmul.f32.gmra.mxu0 %v1361
        %v1832 = vpop.f32.mrf.mxu0
        %v1833 = vadd.f32 %v1793, %v1832
        %1834 = vdwg.mxu0
        %v1835 = vsel %vm580, %v1813, 0.0
        %v1836 = vsel %vm580, %v1833, 0.0
        %v1837 = vadd.f32 %v1835, %v1836
        %1838 = vadd.xlane.f32.xlu0 %v1837
        %v1839 = vpop.xlane.xlu0 %1838
        %v1840 = vrot.slane %v1839, 4
        %v1841 = vadd.f32 %v1839, %v1840
        %v1842 = vrot.slane %v1841, 2
        %v1843 = vadd.f32 %v1841, %v1842
        %v1844 = vrot.slane %v1843, 1
        %v1845 = vadd.f32 %v1843, %v1844
        %s1846 = vtos %v1845
        %s1847 = smul.f32 %s1846, 0.0009765625
        %v1848 = vstv %s1847
        %v1849 = vsub.f32 %v1813, %v1848
        %v1850 = vsub.f32 %v1833, %v1848
        %v1851 = vmul.f32 %v1849, %v1849
        %v1852 = vmul.f32 %v1850, %v1850
        %v1853 = vsel %vm580, %v1851, 0.0
        %v1854 = vsel %vm580, %v1852, 0.0
        %v1855 = vadd.f32 %v1853, %v1854
        %1856 = vadd.xlane.f32.xlu0 %v1855
        %v1857 = vpop.xlane.xlu0 %1856
        %v1858 = vrot.slane %v1857, 4
        %v1859 = vadd.f32 %v1857, %v1858
        %v1860 = vrot.slane %v1859, 2
        %v1861 = vadd.f32 %v1859, %v1860
        %v1862 = vrot.slane %v1861, 1
        %v1863 = vadd.f32 %v1861, %v1862
        %s1864 = vtos %v1863
        %s1865 = smul.f32 %s1864, 0.0009765625
        %s1866 = sadd.f32 %s1865, 1e-05
        %v1867 = vstv %s1866
        %v1868 = vrsqrt.pop %v1867
        %v1869 = vmul.f32 %v1868, %v1867
        %v1870 = vmul.f32 %v1869, %v1868
        %v1871 = vmul.f32 0.5, %v1870
        %v1872 = vsub.f32 1.5, %v1871
        %v1873 = vmul.f32 %v1868, %v1872
        %vm1874 = vweird.f32 %v1867
        %vm1875 = vweird.f32 %v1868
        %vm1876 = vmor %vm1874, %vm1875
        %v1877 = vsel %vm1876, %v1868, %v1873
        %s1878 = vtos %v1877
        %v1879 = vstv %s1878
        %v1880 = vmul.f32 %v1849, %v1879
        %v1881 = vmul.f32 %v1850, %v1879
        %1882 = vset.pattern.permute.xlu0 1
        %1883 = vperm.xlu0 %1882, %v306
        %v1884 = vpop.permute.xlu0 %1883
        %v1886 = vmul.f32 %v1880, %v1884
        %v1887 = vmul.f32 %v1881, %v1884
        %1888 = vset.pattern.permute.xlu0 2
        %1889 = vperm.xlu0 %1888, %v306
        %v1890 = vpop.permute.xlu0 %1889
        %v1892 = vadd.f32 %v1886, %v1890
        %v1893 = vadd.f32 %v1887, %v1890
        %v1896 = vrot.slane %v1893, 4
        %v1897 = vsel %vm580, %v1892, %v1896
        %1899 = vst [vmem:[%s302] sm:$0xff] %v1897
        %s1900 = sand.u32 %s142, 1
        %s1901 = scalar_lea.sflag [#allocation4], %s1900
        %s1902 = sand.u32 %s142, 1
        %s1903 = smul.addr %s1902, 8
        %s1904 = scalar_lea.vmem [#allocation11], %s1903
        // Predicated region
        $region61: #{tpu_custom_call.1} parent=39 // pred_check
          %p1905 = pneg %p152
        $region62: #{tpu_custom_call.1} parent=39 // pred_check_branch
          %1907 = sbr.rel (%p1905) target = $region64
        $region63: #{tpu_custom_call.1} parent=39 // pred_region
          %1909 = vsyncadd %s1901, 0
          %s1910 = smul.addr %s24, 2
          %s1911 = smul.addr %s1910, 4
          %s1912 = scalar_lea.hbm %s5, %s1911
          %s1914 = sshll.u32 %s1904, 4
          %s1915 = int_to_ptr.vmem [resolvable:$true] %s1914
          %s1916 = sshll.u32 %s1912, 4
          %s1917 = int_to_ptr.hbm [resolvable:$true] %s1916
          %1919 = dma.vmem_to_hbm [thread:$0]  %s1915, 128, %s1917, %s1901
        $region64: #{tpu_custom_call.1} parent=39 // pred_fallthru
          _
      $region40: #{tpu_custom_call.1} parent=5 // pred_fallthru
        _
      %p1920 = scmp.le.s32.totalorder 2, %s19
      // Predicated region
      $region65: #{tpu_custom_call.1} parent=5 // pred_check
        %p1921 = pneg %p1920
      $region66: #{tpu_custom_call.1} parent=5 // pred_check_branch
        %1923 = sbr.rel (%p1921) target = $region68
      $region67: #{tpu_custom_call.1} parent=5 // pred_region
        %s1924 = ssub.s32 %s19, 2
        // Predicated region
        $region69: #{tpu_custom_call.1} parent=67 // pred_check
          %p1925 = pneg %p158
        $region70: #{tpu_custom_call.1} parent=67 // pred_check_branch
          %1927 = sbr.rel (%p1925) target = $region72
        $region71: #{tpu_custom_call.1} parent=67 // pred_region
          %s1928 = sand.u32 %s143, 1
          %s1929 = scalar_lea.sflag [#allocation4], %s1928
          %s1930 = sand.u32 %s143, 1
          %s1931 = smul.addr %s1930, 8
          %s1932 = scalar_lea.vmem [#allocation11], %s1931
          %1934 = dma.done %s1929, 128
        $region72: #{tpu_custom_call.1} parent=67 // pred_fallthru
          _
      $region68: #{tpu_custom_call.1} parent=5 // pred_fallthru
        _
    $region6: #{tpu_custom_call.1} parent=1 // loop_footer
      %s23 = sadd.s32 1, %s19
    $region7: #{tpu_custom_call.1} parent=1 // loop_footer_branch
      %18 = sbr.rel target = $region3
    $region8: #{tpu_custom_call.1} parent=1 // loop_exit
      _
    %1935 = vsyncpa [#allocation3], 1
    %s1936 = scalar_lea.sflag [#allocation3], 1
    %1937 = vsyncpa %s1936, 1
    %1938 = vsyncpa [#allocation6], 1
    %1939 = vsyncpa [#allocation9], 1
    %1940 = vsyncpa [#allocation4], 1
    %s1941 = scalar_lea.sflag [#allocation4], 1
    %1942 = vsyncpa %s1941, 1

</llo_original>
